<compile_context>
chip_gen: v6e
topology: v6e:2x2x1
jax: 0.10.0
libtpu: 0.0.40
codegen_flags: <defaults>
</compile_context>

<pallas_src>
import functools
from collections import namedtuple

import jax
import jax.numpy as jnp
from jax import lax
from jax.experimental import pallas as pl
from jax.experimental.pallas import tpu as pltpu

Genotype = namedtuple("Genotype", "normal normal_concat")

# steps=3 -> total_step = 6 ops; indices[i] <= i.
GENOTYPE = Genotype(
    normal=[("conv_3x3", 0), ("skip_connect", 0), ("conv_3x3", 1),
            ("avg_pool_3x3", 2), ("skip_connect", 3), ("conv_3x3", 4)],
    normal_concat=[4, 5, 6])


# ------------------------------- Pallas kernel -------------------------------

def rfa_kernel(*refs, op_names, indices, steps, W, Cr, use_im2col):
    n_conv = sum(1 for n in op_names if n == "conv_3x3")
    x_ref, wb_ref = refs[0], refs[1]
    conv_w_refs = refs[2:2 + n_conv]
    w1x1_ref, wse1_ref, wse2_ref, out_ref = refs[2 + n_conv:]

    bt, C, HW = x_ref.shape

    # Column-border masks, built in-kernel at full (Cr, HW) shape so selects
    # need no i1 broadcast.  Computed once, reused by every tap of every state.
    col = lax.broadcasted_iota(jnp.int32, (Cr, HW), 1) % W
    not_left = col != 0            # x != 0
    not_right = col != (W - 1)     # x != W-1

    def dx_planes(s):
        """Column-shifted copies of s=(Cr, HW): value at (y, x+dx), dx in (-1,0,+1)."""
        c, hw = s.shape
        z1 = jnp.zeros((c, 1), s.dtype)
        left = jnp.where(not_left, jnp.concatenate([z1, s[:, :hw - 1]], axis=1), 0)
        right = jnp.where(not_right, jnp.concatenate([s[:, 1:], z1], axis=1), 0)
        return (left, s, right)

    def taps9(s):
        """9 zero-padded 3x3-neighborhood taps of s=(Cr, HW).

        Only the two dx = +-1 shifts are cross-lane (XLU) work; the dy*W row
        shifts are slices of a zero-extended plane at static offsets {0, W, 2W},
        vreg-aligned whenever W % 128 == 0.  Tap order (dy, dx) matches the
        (kh, kw, cin) weight layout.
        """
        c, hw = s.shape
        planes = dx_planes(s)
        zW = jnp.zeros((c, W), s.dtype)
        padded = [jnp.concatenate([zW, p, zW], axis=1) for p in planes]
        taps = []
        for dy in (-1, 0, 1):
            for dxi in range(3):
                if dy == 0:
                    taps.append(planes[dxi])
                else:
                    off = W + dy * W                      # static: 0 or 2W
                    taps.append(padded[dxi][:, off:off + hw])
        return taps

    def conv3x3(s, w_ref):
        t = taps9(s.astype(jnp.bfloat16))                 # bf16 taps
        if use_im2col:
            stack = jnp.concatenate(t, axis=0)            # (9*Cr, HW) bf16
            return jnp.dot(w_ref[...], stack, preferred_element_type=jnp.float32)
        # 9 accumulated K=Cr matmuls: no (9*Cr, HW) buffer / axis-0 concat.
        acc = None
        for ti, tap in enumerate(t):
            part = jnp.dot(w_ref[:, ti * Cr:(ti + 1) * Cr], tap,
                           preferred_element_type=jnp.float32)
            acc = part if acc is None else acc + part
        return acc

    def avg_pool3x3(s):
        # count_include_pad=True semantics (always /9), matching the reference.
        t = taps9(s.astype(jnp.bfloat16))
        acc = ((t[0] + t[1] + t[2]).astype(jnp.float32)
               + (t[3] + t[4] + t[5]).astype(jnp.float32)
               + (t[6] + t[7] + t[8]).astype(jnp.float32))
        return acc * (1.0 / 9.0)

    for b in range(bt):
        x = x_ref[b]                                      # (C, HW), native dtype
        # bottleneck 1x1 conv: (Cr, C) @ (C, HW)
        t0 = jnp.dot(wb_ref[...], x.astype(jnp.bfloat16),
                     preferred_element_type=jnp.float32)  # (Cr, HW) f32

        states = [t0]
        ci = 0
        for name, idx in zip(op_names, indices):
            h = states[idx]
            if name == "conv_3x3":
                s = conv3x3(h, conv_w_refs[ci]); ci += 1
            elif name == "avg_pool_3x3":
                s = avg_pool3x3(h)
            elif name == "skip_connect":
                s = h
            else:
                raise NotImplementedError(name)
            states.append(s)

        # 1x1 fuse of the last `steps` states as accumulated column-slice matmuls
        # (no (steps*Cr, HW) concat buffer), then residual in f32.
        y = None
        for si, st in enumerate(states[-steps:]):
            part = jnp.dot(w1x1_ref[:, si * Cr:(si + 1) * Cr],
                           st.astype(jnp.bfloat16),
                           preferred_element_type=jnp.float32)   # (C, HW)
            y = part if y is None else y + part
        y = y + x.astype(jnp.float32)

        # Squeeze-Excite, fully in-register (global avg pool over the lane axis).
        ybar = jnp.sum(y, axis=1, keepdims=True) * (1.0 / HW)                        # (C, 1)
        h1 = jnp.maximum(jnp.sum(wse1_ref[...] * ybar, axis=0, keepdims=True), 0.0)  # (1, Cse)
        g = jax.nn.sigmoid(jnp.sum(wse2_ref[...] * h1, axis=1, keepdims=True))       # (C, 1)

        out_ref[b] = (y * g).astype(out_ref.dtype)


# --------------------------------- wrapper -----------------------------------

def _default_use_im2col(Cr):
    kind = ""
    try:
        kind = jax.devices()[0].device_kind.lower()
    except Exception:
        pass
    narrow_mxu = any(t in kind for t in ("v2", "v3", "v4", "v5"))
    # On 128-deep-MXU parts, K=Cr per push already fills the MXU once Cr >= 128,
    # so the (9*Cr, HW) im2col stack buys nothing and just costs VMEM.
    return not (narrow_mxu and Cr >= 128)


def receptive_field_attention_pallas(x_nchw, params, genotype, steps=3, *,
                                     batch_tile=None, use_im2col=None,
                                     out_dtype=None):
    B, C, H, W = x_nchw.shape
    HW = H * W
    Cr = params["w_bottle"].shape[0]
    op_names = tuple(n for n, _ in genotype.normal)
    indices = tuple(i for _, i in genotype.normal)
    n_conv = sum(1 for n in op_names if n == "conv_3x3")
    assert len(params["w_ops"]) == n_conv
    assert len(op_names) == (1 + steps) * steps // 2
    # The kernel concatenates the last `steps` states; verify the genotype's
    # normal_concat names exactly those nodes (guards the silent-mismatch case).
    total_step = len(op_names)
    assert tuple(genotype.normal_concat) == tuple(
        range(total_step - steps + 1, total_step + 1)), \
        "kernel assumes normal_concat == last `steps` node indices"

    # NCHW -> (B, C, H*W): free reshape, lane-dense; keep the NATIVE dtype
    # (no forced f32 cast -> half the HBM traffic for bf16 activations).
    x_flat = x_nchw.reshape(B, C, HW)
    if out_dtype is None:
        out_dtype = x_flat.dtype
    if use_im2col is None:
        use_im2col = _default_use_im2col(Cr)

    # Batch tile: fold several images per grid step when a single image is tiny.
    if batch_tile is None:
        per_img = C * HW * x_flat.dtype.itemsize
        batch_tile = 1
        for cand in range(1, B + 1):
            if B % cand == 0 and cand * per_img <= 2 * 1024 * 1024:
                batch_tile = cand
    assert B % batch_tile == 0, (B, batch_tile)

    # Weights: bf16 for MXU operands, f32 for the tiny SE epilogue.
    wb = params["w_bottle"].astype(jnp.bfloat16)                           # (Cr, C)
    w_ops = [w.transpose(0, 2, 3, 1).reshape(Cr, 9 * Cr).astype(jnp.bfloat16)
             for w in params["w_ops"]]                                     # (Cr, 9*Cr)
    w1x1 = params["w_1x1"].astype(jnp.bfloat16)                            # (C, steps*Cr)
    wse1t = params["w_se1"].T.astype(jnp.float32)                          # (C, Cse)
    wse2 = params["w_se2"].astype(jnp.float32)                             # (C, Cse)

    inputs = [x_flat, wb, *w_ops, w1x1, wse1t, wse2]

    in_specs = ([pl.BlockSpec((batch_tile, C, HW), lambda b: (b, 0, 0))]
                + [pl.BlockSpec(a.shape, lambda b: (0, 0)) for a in inputs[1:]])
    out_spec = pl.BlockSpec((batch_tile, C, HW), lambda b: (b, 0, 0))

    # VMEM limit derived from the working set (+ headroom), clamped to capacity.
    weight_bytes = sum(int(a.size) * a.dtype.itemsize for a in inputs[1:])
    io_block = batch_tile * C * HW * (x_flat.dtype.itemsize
                                      + jnp.dtype(out_dtype).itemsize)
    n_states = 1 + len(op_names)
    interm = batch_tile * (n_states * Cr * HW * 4                 # f32 states
                           + (9 * Cr * HW * 2 if use_im2col else 0)
                           + 3 * Cr * (HW + 2 * W) * 2            # padded dx planes
                           + 2 * C * HW * 4)                      # y + headroom
    est = 2 * io_block + 2 * weight_bytes + interm
    try:
        cap = int(getattr(pltpu.get_tpu_info(), "vmem_capacity_bytes",
                          128 * 1024 * 1024))
    except Exception:
        cap = 128 * 1024 * 1024
    vmem_limit = max(32 * 1024 * 1024, int(1.25 * est))
    vmem_limit = max(8 * 1024 * 1024, min(vmem_limit, int(0.9 * cap)))

    kernel = functools.partial(rfa_kernel, op_names=op_names, indices=indices,
                               steps=steps, W=W, Cr=Cr, use_im2col=use_im2col)

    out = pl.pallas_call(
        kernel,
        out_shape=jax.ShapeDtypeStruct((B, C, HW), out_dtype),
        grid=(B // batch_tile,),
        in_specs=in_specs,
        out_specs=out_spec,
        compiler_params=pltpu.CompilerParams(
            dimension_semantics=("parallel",),        # megacore over batch tiles
            vmem_limit_bytes=vmem_limit),
    )(*inputs)
    return out.reshape(B, C, H, W)


# --------------------------- reference & parameters ---------------------------

def init_params(key, C, reduction, genotype, steps):
    Cr = C // reduction          # bottleneck width
    Cse = C // reduction         # SE hidden width (module passes same reduction)
    n_conv = sum(1 for n, _ in genotype.normal if n == "conv_3x3")
    ks = jax.random.split(key, 5 + n_conv)
    return {
        "w_bottle": 0.1 * jax.random.normal(ks[0], (Cr, C), jnp.float32),
        "w_ops": [0.1 * jax.random.normal(ks[1 + i], (Cr, Cr, 3, 3), jnp.float32)
                  for i in range(n_conv)],
        "w_1x1": 0.1 * jax.random.normal(ks[1 + n_conv], (C, steps * Cr), jnp.float32),
        "w_se1": 0.1 * jax.random.normal(ks[2 + n_conv], (Cse, C), jnp.float32),
        "w_se2": 0.1 * jax.random.normal(ks[3 + n_conv], (C, Cse), jnp.float32),
    }


def ref_rfa(x, params, genotype, steps):
    """Pure-JAX f32 reference of the same forward pass (NCHW)."""
    def conv1x1(h, w):                      # w: (Cout, Cin)
        return jnp.einsum("oc,bchw->bohw", w, h)

    def conv3x3(h, w):                      # w: (Cout, Cin, 3, 3), pad 1, stride 1
        return lax.conv_general_dilated(
            h, w, window_strides=(1, 1), padding=((1, 1), (1, 1)),
            dimension_numbers=("NCHW", "OIHW", "NCHW"))

    def avgpool3x3(h):                      # count_include_pad=True
        s = lax.reduce_window(h, 0.0, lax.add, (1, 1, 3, 3), (1, 1, 1, 1),
                              padding=((0, 0), (0, 0), (1, 1), (1, 1)))
        return s / 9.0

    t = conv1x1(x, params["w_bottle"])
    states = [t]
    ci = 0
    for name, idx in genotype.normal:
        h = states[idx]
        if name == "conv_3x3":
            s = conv3x3(h, params["w_ops"][ci]); ci += 1
        elif name == "avg_pool_3x3":
            s = avgpool3x3(h)
        else:                               # skip_connect
            s = h
        states.append(s)

    node = jnp.concatenate(states[-steps:], axis=1)
    node = conv1x1(node, params["w_1x1"]) + x

    ybar = jnp.mean(node, axis=(2, 3))                     # (B, C)
    h1 = jax.nn.relu(ybar @ params["w_se1"].T)             # (B, Cse)
    g = jax.nn.sigmoid(h1 @ params["w_se2"].T)             # (B, C)
    return node * g[:, :, None, None]


if __name__ == "__main__":
    key = jax.random.PRNGKey(0)
    kx, kp = jax.random.split(key)

    B, C, H, W = 2, 32, 16, 16
    STEPS, REDUCTION = 3, 4

    x = jax.random.normal(kx, (B, C, H, W), jnp.float32)
    params = init_params(kp, C, REDUCTION, GENOTYPE, STEPS)

    out = receptive_field_attention_pallas(x, params, GENOTYPE, STEPS)
    out = jax.block_until_ready(out)

    ref = ref_rfa(x, params, GENOTYPE, STEPS)
    assert out.shape == ref.shape, (out.shape, ref.shape)
    err = float(jnp.max(jnp.abs(out - ref)))
    # bf16 MXU operands / bf16 tap generation vs f32 reference -> relaxed tolerance
    assert err < 5e-2, err

    print("KERNEL_OK")
</pallas_src>

<mosaic_0001>
module attributes {stable_mosaic.version = 11 : i64} {
  func.func @rfa_kernel(%arg0: i32, %arg1: memref<2x32x256xf32, #tpu.memory_space<vmem>>, %arg2: memref<8x32xbf16, #tpu.memory_space<vmem>>, %arg3: memref<8x72xbf16, #tpu.memory_space<vmem>>, %arg4: memref<8x72xbf16, #tpu.memory_space<vmem>>, %arg5: memref<8x72xbf16, #tpu.memory_space<vmem>>, %arg6: memref<32x24xbf16, #tpu.memory_space<vmem>>, %arg7: memref<32x8xf32, #tpu.memory_space<vmem>>, %arg8: memref<32x8xf32, #tpu.memory_space<vmem>>, %arg9: memref<2x32x256xf32, #tpu.memory_space<vmem>>) attributes {dimension_semantics = [#tpu.dimension_semantics<parallel>], iteration_bounds = array<i64: 1>, scalar_prefetch = 0 : i64, scratch_operands = 0 : i64, tpu.core_type = #tpu.core_type<tc>, window_params = [{transform_indices = @transform_0, window_bounds = array<i64: 2, 32, 256>}, {pipeline_mode = #tpu.pipeline_mode<synchronous>, transform_indices = @transform_1, window_bounds = array<i64: 8, 32>}, {pipeline_mode = #tpu.pipeline_mode<synchronous>, transform_indices = @transform_2, window_bounds = array<i64: 8, 72>}, {pipeline_mode = #tpu.pipeline_mode<synchronous>, transform_indices = @transform_3, window_bounds = array<i64: 8, 72>}, {pipeline_mode = #tpu.pipeline_mode<synchronous>, transform_indices = @transform_4, window_bounds = array<i64: 8, 72>}, {pipeline_mode = #tpu.pipeline_mode<synchronous>, transform_indices = @transform_5, window_bounds = array<i64: 32, 24>}, {pipeline_mode = #tpu.pipeline_mode<synchronous>, transform_indices = @transform_6, window_bounds = array<i64: 32, 8>}, {pipeline_mode = #tpu.pipeline_mode<synchronous>, transform_indices = @transform_7, window_bounds = array<i64: 32, 8>}, {transform_indices = @transform_8, window_bounds = array<i64: 2, 32, 256>}]} {
    %0 = tpu.iota {dimensions = array<i32: 1>} : vector<8x256xi32>
    %c16_i32 = arith.constant 16 : i32
    %c0_i32 = arith.constant 0 : i32
    %1 = arith.cmpi eq, %c16_i32, %c0_i32 : i32
    %c1_i32 = arith.constant 1 : i32
    %2 = arith.select %1, %c1_i32, %c16_i32 : i32
    %3 = vector.broadcast %2 : i32 to vector<8x256xi32>
    %4 = arith.remsi %0, %3 : vector<8x256xi32>
    %c0_i32_0 = arith.constant 0 : i32
    %5 = vector.broadcast %c0_i32_0 : i32 to vector<8x256xi32>
    %6 = arith.cmpi ne, %4, %5 : vector<8x256xi32>
    %c0_i32_1 = arith.constant 0 : i32
    %7 = vector.broadcast %c0_i32_1 : i32 to vector<8x256xi32>
    %8 = arith.cmpi slt, %4, %7 : vector<8x256xi32>
    %c0_i32_2 = arith.constant 0 : i32
    %9 = arith.cmpi slt, %2, %c0_i32_2 : i32
    %10 = vector.broadcast %9 : i1 to vector<8x256xi1>
    %11 = vector.broadcast %10 : vector<8x256xi1> to vector<8x256xi1>
    %12 = arith.xori %8, %11 : vector<8x256xi1>
    %13 = arith.andi %12, %6 : vector<8x256xi1>
    %14 = vector.broadcast %2 : i32 to vector<8x256xi32>
    %15 = arith.addi %4, %14 : vector<8x256xi32>
    %16 = arith.select %13, %15, %4 : vector<8x256xi1>, vector<8x256xi32>
    %c0_i32_3 = arith.constant 0 : i32
    %17 = vector.broadcast %c0_i32_3 : i32 to vector<8x256xi32>
    %18 = arith.cmpi ne, %16, %17 : vector<8x256xi32>
    %c15_i32 = arith.constant 15 : i32
    %19 = vector.broadcast %c15_i32 : i32 to vector<8x256xi32>
    %20 = arith.cmpi ne, %16, %19 : vector<8x256xi32>
    %c0 = arith.constant 0 : index
    %c0_4 = arith.constant 0 : index
    %c0_5 = arith.constant 0 : index
    %21 = vector.load %arg1[%c0, %c0_4, %c0_5] : memref<2x32x256xf32, #tpu.memory_space<vmem>>, vector<1x32x256xf32>
    %22 = vector.shape_cast %21 : vector<1x32x256xf32> to vector<32x256xf32>
    %c0_6 = arith.constant 0 : index
    %c0_7 = arith.constant 0 : index
    %23 = vector.load %arg2[%c0_6, %c0_7] : memref<8x32xbf16, #tpu.memory_space<vmem>>, vector<8x32xbf16>
    %24 = arith.truncf %22 : vector<32x256xf32> to vector<32x256xbf16>
    %cst = arith.constant dense<0.000000e+00> : vector<8x256xf32>
    %25 = tpu.matmul %23, %24, %cst {dimension_numbers = #tpu.dot_dimension_numbers<[1], [0], [0], [1], [0, 0, 1, 1], [], []>} : vector<8x32xbf16>, vector<32x256xbf16>, vector<8x256xf32> -> vector<8x256xf32>
    %26 = arith.truncf %25 : vector<8x256xf32> to vector<8x256xbf16>
    %cst_8 = arith.constant 0.000000e+00 : bf16
    %27 = vector.broadcast %cst_8 : bf16 to vector<8x1xbf16>
    %28 = vector.extract_strided_slice %26 {offsets = [0, 0], sizes = [8, 255], strides = [1, 1]} : vector<8x256xbf16> to vector<8x255xbf16>
    %29 = tpu.concatenate %27, %28 in 1 : vector<8x1xbf16>, vector<8x255xbf16> -> vector<8x256xbf16>
    %c0_i32_9 = arith.constant 0 : i32
    %30 = arith.sitofp %c0_i32_9 : i32 to bf16
    %31 = vector.broadcast %30 : bf16 to vector<8x256xbf16>
    %32 = arith.select %18, %29, %31 : vector<8x256xi1>, vector<8x256xbf16>
    %33 = vector.extract_strided_slice %26 {offsets = [0, 1], sizes = [8, 255], strides = [1, 1]} : vector<8x256xbf16> to vector<8x255xbf16>
    %34 = tpu.concatenate %33, %27 in 1 : vector<8x255xbf16>, vector<8x1xbf16> -> vector<8x256xbf16>
    %c0_i32_10 = arith.constant 0 : i32
    %35 = arith.sitofp %c0_i32_10 : i32 to bf16
    %36 = vector.broadcast %35 : bf16 to vector<8x256xbf16>
    %37 = arith.select %20, %34, %36 : vector<8x256xi1>, vector<8x256xbf16>
    %cst_11 = arith.constant 0.000000e+00 : bf16
    %38 = vector.broadcast %cst_11 : bf16 to vector<8x16xbf16>
    %39 = tpu.concatenate %38, %32, %38 in 1 : vector<8x16xbf16>, vector<8x256xbf16>, vector<8x16xbf16> -> vector<8x288xbf16>
    %40 = tpu.concatenate %38, %26, %38 in 1 : vector<8x16xbf16>, vector<8x256xbf16>, vector<8x16xbf16> -> vector<8x288xbf16>
    %41 = tpu.concatenate %38, %37, %38 in 1 : vector<8x16xbf16>, vector<8x256xbf16>, vector<8x16xbf16> -> vector<8x288xbf16>
    %42 = vector.extract_strided_slice %39 {offsets = [0, 0], sizes = [8, 256], strides = [1, 1]} : vector<8x288xbf16> to vector<8x256xbf16>
    %43 = vector.extract_strided_slice %40 {offsets = [0, 0], sizes = [8, 256], strides = [1, 1]} : vector<8x288xbf16> to vector<8x256xbf16>
    %44 = vector.extract_strided_slice %41 {offsets = [0, 0], sizes = [8, 256], strides = [1, 1]} : vector<8x288xbf16> to vector<8x256xbf16>
    %45 = vector.extract_strided_slice %39 {offsets = [0, 32], sizes = [8, 256], strides = [1, 1]} : vector<8x288xbf16> to vector<8x256xbf16>
    %46 = vector.extract_strided_slice %40 {offsets = [0, 32], sizes = [8, 256], strides = [1, 1]} : vector<8x288xbf16> to vector<8x256xbf16>
    %47 = vector.extract_strided_slice %41 {offsets = [0, 32], sizes = [8, 256], strides = [1, 1]} : vector<8x288xbf16> to vector<8x256xbf16>
    %48 = tpu.concatenate %42, %43, %44, %32, %26, %37, %45, %46, %47 in 0 : vector<8x256xbf16>, vector<8x256xbf16>, vector<8x256xbf16>, vector<8x256xbf16>, vector<8x256xbf16>, vector<8x256xbf16>, vector<8x256xbf16>, vector<8x256xbf16>, vector<8x256xbf16> -> vector<72x256xbf16>
    %c0_12 = arith.constant 0 : index
    %c0_13 = arith.constant 0 : index
    %49 = vector.load %arg3[%c0_12, %c0_13] : memref<8x72xbf16, #tpu.memory_space<vmem>>, vector<8x72xbf16>
    %cst_14 = arith.constant dense<0.000000e+00> : vector<8x256xf32>
    %50 = tpu.matmul %49, %48, %cst_14 {dimension_numbers = #tpu.dot_dimension_numbers<[1], [0], [0], [1], [0, 0, 1, 1], [], []>} : vector<8x72xbf16>, vector<72x256xbf16>, vector<8x256xf32> -> vector<8x256xf32>
    %51 = arith.truncf %50 : vector<8x256xf32> to vector<8x256xbf16>
    %cst_15 = arith.constant 0.000000e+00 : bf16
    %52 = vector.broadcast %cst_15 : bf16 to vector<8x1xbf16>
    %53 = vector.extract_strided_slice %51 {offsets = [0, 0], sizes = [8, 255], strides = [1, 1]} : vector<8x256xbf16> to vector<8x255xbf16>
    %54 = tpu.concatenate %52, %53 in 1 : vector<8x1xbf16>, vector<8x255xbf16> -> vector<8x256xbf16>
    %c0_i32_16 = arith.constant 0 : i32
    %55 = arith.sitofp %c0_i32_16 : i32 to bf16
    %56 = vector.broadcast %55 : bf16 to vector<8x256xbf16>
    %57 = arith.select %18, %54, %56 : vector<8x256xi1>, vector<8x256xbf16>
    %58 = vector.extract_strided_slice %51 {offsets = [0, 1], sizes = [8, 255], strides = [1, 1]} : vector<8x256xbf16> to vector<8x255xbf16>
    %59 = tpu.concatenate %58, %52 in 1 : vector<8x255xbf16>, vector<8x1xbf16> -> vector<8x256xbf16>
    %c0_i32_17 = arith.constant 0 : i32
    %60 = arith.sitofp %c0_i32_17 : i32 to bf16
    %61 = vector.broadcast %60 : bf16 to vector<8x256xbf16>
    %62 = arith.select %20, %59, %61 : vector<8x256xi1>, vector<8x256xbf16>
    %cst_18 = arith.constant 0.000000e+00 : bf16
    %63 = vector.broadcast %cst_18 : bf16 to vector<8x16xbf16>
    %64 = tpu.concatenate %63, %57, %63 in 1 : vector<8x16xbf16>, vector<8x256xbf16>, vector<8x16xbf16> -> vector<8x288xbf16>
    %65 = tpu.concatenate %63, %51, %63 in 1 : vector<8x16xbf16>, vector<8x256xbf16>, vector<8x16xbf16> -> vector<8x288xbf16>
    %66 = tpu.concatenate %63, %62, %63 in 1 : vector<8x16xbf16>, vector<8x256xbf16>, vector<8x16xbf16> -> vector<8x288xbf16>
    %67 = vector.extract_strided_slice %64 {offsets = [0, 0], sizes = [8, 256], strides = [1, 1]} : vector<8x288xbf16> to vector<8x256xbf16>
    %68 = vector.extract_strided_slice %65 {offsets = [0, 0], sizes = [8, 256], strides = [1, 1]} : vector<8x288xbf16> to vector<8x256xbf16>
    %69 = vector.extract_strided_slice %66 {offsets = [0, 0], sizes = [8, 256], strides = [1, 1]} : vector<8x288xbf16> to vector<8x256xbf16>
    %70 = vector.extract_strided_slice %64 {offsets = [0, 32], sizes = [8, 256], strides = [1, 1]} : vector<8x288xbf16> to vector<8x256xbf16>
    %71 = vector.extract_strided_slice %65 {offsets = [0, 32], sizes = [8, 256], strides = [1, 1]} : vector<8x288xbf16> to vector<8x256xbf16>
    %72 = vector.extract_strided_slice %66 {offsets = [0, 32], sizes = [8, 256], strides = [1, 1]} : vector<8x288xbf16> to vector<8x256xbf16>
    %73 = tpu.concatenate %67, %68, %69, %57, %51, %62, %70, %71, %72 in 0 : vector<8x256xbf16>, vector<8x256xbf16>, vector<8x256xbf16>, vector<8x256xbf16>, vector<8x256xbf16>, vector<8x256xbf16>, vector<8x256xbf16>, vector<8x256xbf16>, vector<8x256xbf16> -> vector<72x256xbf16>
    %c0_19 = arith.constant 0 : index
    %c0_20 = arith.constant 0 : index
    %74 = vector.load %arg4[%c0_19, %c0_20] : memref<8x72xbf16, #tpu.memory_space<vmem>>, vector<8x72xbf16>
    %cst_21 = arith.constant dense<0.000000e+00> : vector<8x256xf32>
    %75 = tpu.matmul %74, %73, %cst_21 {dimension_numbers = #tpu.dot_dimension_numbers<[1], [0], [0], [1], [0, 0, 1, 1], [], []>} : vector<8x72xbf16>, vector<72x256xbf16>, vector<8x256xf32> -> vector<8x256xf32>
    %76 = arith.truncf %25 : vector<8x256xf32> to vector<8x256xbf16>
    %cst_22 = arith.constant 0.000000e+00 : bf16
    %77 = vector.broadcast %cst_22 : bf16 to vector<8x1xbf16>
    %78 = vector.extract_strided_slice %76 {offsets = [0, 0], sizes = [8, 255], strides = [1, 1]} : vector<8x256xbf16> to vector<8x255xbf16>
    %79 = tpu.concatenate %77, %78 in 1 : vector<8x1xbf16>, vector<8x255xbf16> -> vector<8x256xbf16>
    %c0_i32_23 = arith.constant 0 : i32
    %80 = arith.sitofp %c0_i32_23 : i32 to bf16
    %81 = vector.broadcast %80 : bf16 to vector<8x256xbf16>
    %82 = arith.select %18, %79, %81 : vector<8x256xi1>, vector<8x256xbf16>
    %83 = vector.extract_strided_slice %76 {offsets = [0, 1], sizes = [8, 255], strides = [1, 1]} : vector<8x256xbf16> to vector<8x255xbf16>
    %84 = tpu.concatenate %83, %77 in 1 : vector<8x255xbf16>, vector<8x1xbf16> -> vector<8x256xbf16>
    %c0_i32_24 = arith.constant 0 : i32
    %85 = arith.sitofp %c0_i32_24 : i32 to bf16
    %86 = vector.broadcast %85 : bf16 to vector<8x256xbf16>
    %87 = arith.select %20, %84, %86 : vector<8x256xi1>, vector<8x256xbf16>
    %cst_25 = arith.constant 0.000000e+00 : bf16
    %88 = vector.broadcast %cst_25 : bf16 to vector<8x16xbf16>
    %89 = tpu.concatenate %88, %82, %88 in 1 : vector<8x16xbf16>, vector<8x256xbf16>, vector<8x16xbf16> -> vector<8x288xbf16>
    %90 = tpu.concatenate %88, %76, %88 in 1 : vector<8x16xbf16>, vector<8x256xbf16>, vector<8x16xbf16> -> vector<8x288xbf16>
    %91 = tpu.concatenate %88, %87, %88 in 1 : vector<8x16xbf16>, vector<8x256xbf16>, vector<8x16xbf16> -> vector<8x288xbf16>
    %92 = vector.extract_strided_slice %89 {offsets = [0, 0], sizes = [8, 256], strides = [1, 1]} : vector<8x288xbf16> to vector<8x256xbf16>
    %93 = vector.extract_strided_slice %90 {offsets = [0, 0], sizes = [8, 256], strides = [1, 1]} : vector<8x288xbf16> to vector<8x256xbf16>
    %94 = vector.extract_strided_slice %91 {offsets = [0, 0], sizes = [8, 256], strides = [1, 1]} : vector<8x288xbf16> to vector<8x256xbf16>
    %95 = vector.extract_strided_slice %89 {offsets = [0, 32], sizes = [8, 256], strides = [1, 1]} : vector<8x288xbf16> to vector<8x256xbf16>
    %96 = vector.extract_strided_slice %90 {offsets = [0, 32], sizes = [8, 256], strides = [1, 1]} : vector<8x288xbf16> to vector<8x256xbf16>
    %97 = vector.extract_strided_slice %91 {offsets = [0, 32], sizes = [8, 256], strides = [1, 1]} : vector<8x288xbf16> to vector<8x256xbf16>
    %98 = arith.addf %92, %93 : vector<8x256xbf16>
    %99 = arith.addf %98, %94 : vector<8x256xbf16>
    %100 = arith.extf %99 : vector<8x256xbf16> to vector<8x256xf32>
    %101 = arith.addf %82, %76 : vector<8x256xbf16>
    %102 = arith.addf %101, %87 : vector<8x256xbf16>
    %103 = arith.extf %102 : vector<8x256xbf16> to vector<8x256xf32>
    %104 = arith.addf %100, %103 : vector<8x256xf32>
    %105 = arith.addf %95, %96 : vector<8x256xbf16>
    %106 = arith.addf %105, %97 : vector<8x256xbf16>
    %107 = arith.extf %106 : vector<8x256xbf16> to vector<8x256xf32>
    %108 = arith.addf %104, %107 : vector<8x256xf32>
    %cst_26 = arith.constant 0.111111112 : f32
    %109 = vector.broadcast %cst_26 : f32 to vector<8x256xf32>
    %110 = arith.mulf %108, %109 : vector<8x256xf32>
    %111 = arith.truncf %110 : vector<8x256xf32> to vector<8x256xbf16>
    %cst_27 = arith.constant 0.000000e+00 : bf16
    %112 = vector.broadcast %cst_27 : bf16 to vector<8x1xbf16>
    %113 = vector.extract_strided_slice %111 {offsets = [0, 0], sizes = [8, 255], strides = [1, 1]} : vector<8x256xbf16> to vector<8x255xbf16>
    %114 = tpu.concatenate %112, %113 in 1 : vector<8x1xbf16>, vector<8x255xbf16> -> vector<8x256xbf16>
    %c0_i32_28 = arith.constant 0 : i32
    %115 = arith.sitofp %c0_i32_28 : i32 to bf16
    %116 = vector.broadcast %115 : bf16 to vector<8x256xbf16>
    %117 = arith.select %18, %114, %116 : vector<8x256xi1>, vector<8x256xbf16>
    %118 = vector.extract_strided_slice %111 {offsets = [0, 1], sizes = [8, 255], strides = [1, 1]} : vector<8x256xbf16> to vector<8x255xbf16>
    %119 = tpu.concatenate %118, %112 in 1 : vector<8x255xbf16>, vector<8x1xbf16> -> vector<8x256xbf16>
    %c0_i32_29 = arith.constant 0 : i32
    %120 = arith.sitofp %c0_i32_29 : i32 to bf16
    %121 = vector.broadcast %120 : bf16 to vector<8x256xbf16>
    %122 = arith.select %20, %119, %121 : vector<8x256xi1>, vector<8x256xbf16>
    %cst_30 = arith.constant 0.000000e+00 : bf16
    %123 = vector.broadcast %cst_30 : bf16 to vector<8x16xbf16>
    %124 = tpu.concatenate %123, %117, %123 in 1 : vector<8x16xbf16>, vector<8x256xbf16>, vector<8x16xbf16> -> vector<8x288xbf16>
    %125 = tpu.concatenate %123, %111, %123 in 1 : vector<8x16xbf16>, vector<8x256xbf16>, vector<8x16xbf16> -> vector<8x288xbf16>
    %126 = tpu.concatenate %123, %122, %123 in 1 : vector<8x16xbf16>, vector<8x256xbf16>, vector<8x16xbf16> -> vector<8x288xbf16>
    %127 = vector.extract_strided_slice %124 {offsets = [0, 0], sizes = [8, 256], strides = [1, 1]} : vector<8x288xbf16> to vector<8x256xbf16>
    %128 = vector.extract_strided_slice %125 {offsets = [0, 0], sizes = [8, 256], strides = [1, 1]} : vector<8x288xbf16> to vector<8x256xbf16>
    %129 = vector.extract_strided_slice %126 {offsets = [0, 0], sizes = [8, 256], strides = [1, 1]} : vector<8x288xbf16> to vector<8x256xbf16>
    %130 = vector.extract_strided_slice %124 {offsets = [0, 32], sizes = [8, 256], strides = [1, 1]} : vector<8x288xbf16> to vector<8x256xbf16>
    %131 = vector.extract_strided_slice %125 {offsets = [0, 32], sizes = [8, 256], strides = [1, 1]} : vector<8x288xbf16> to vector<8x256xbf16>
    %132 = vector.extract_strided_slice %126 {offsets = [0, 32], sizes = [8, 256], strides = [1, 1]} : vector<8x288xbf16> to vector<8x256xbf16>
    %133 = tpu.concatenate %127, %128, %129, %117, %111, %122, %130, %131, %132 in 0 : vector<8x256xbf16>, vector<8x256xbf16>, vector<8x256xbf16>, vector<8x256xbf16>, vector<8x256xbf16>, vector<8x256xbf16>, vector<8x256xbf16>, vector<8x256xbf16>, vector<8x256xbf16> -> vector<72x256xbf16>
    %c0_31 = arith.constant 0 : index
    %c0_32 = arith.constant 0 : index
    %134 = vector.load %arg5[%c0_31, %c0_32] : memref<8x72xbf16, #tpu.memory_space<vmem>>, vector<8x72xbf16>
    %cst_33 = arith.constant dense<0.000000e+00> : vector<8x256xf32>
    %135 = tpu.matmul %134, %133, %cst_33 {dimension_numbers = #tpu.dot_dimension_numbers<[1], [0], [0], [1], [0, 0, 1, 1], [], []>} : vector<8x72xbf16>, vector<72x256xbf16>, vector<8x256xf32> -> vector<8x256xf32>
    %c0_34 = arith.constant 0 : index
    %c0_35 = arith.constant 0 : index
    %136 = vector.load %arg6[%c0_34, %c0_35] : memref<32x24xbf16, #tpu.memory_space<vmem>>, vector<32x8xbf16>
    %137 = arith.truncf %110 : vector<8x256xf32> to vector<8x256xbf16>
    %cst_36 = arith.constant dense<0.000000e+00> : vector<32x256xf32>
    %138 = tpu.matmul %136, %137, %cst_36 {dimension_numbers = #tpu.dot_dimension_numbers<[1], [0], [0], [1], [0, 0, 1, 1], [], []>} : vector<32x8xbf16>, vector<8x256xbf16>, vector<32x256xf32> -> vector<32x256xf32>
    %c0_37 = arith.constant 0 : index
    %c8 = arith.constant 8 : index
    %139 = vector.load %arg6[%c0_37, %c8] : memref<32x24xbf16, #tpu.memory_space<vmem>>, vector<32x8xbf16>
    %140 = arith.truncf %75 : vector<8x256xf32> to vector<8x256xbf16>
    %cst_38 = arith.constant dense<0.000000e+00> : vector<32x256xf32>
    %141 = tpu.matmul %139, %140, %cst_38 {dimension_numbers = #tpu.dot_dimension_numbers<[1], [0], [0], [1], [0, 0, 1, 1], [], []>} : vector<32x8xbf16>, vector<8x256xbf16>, vector<32x256xf32> -> vector<32x256xf32>
    %142 = arith.addf %138, %141 : vector<32x256xf32>
    %c0_39 = arith.constant 0 : index
    %c16 = arith.constant 16 : index
    %143 = vector.load %arg6[%c0_39, %c16] : memref<32x24xbf16, #tpu.memory_space<vmem>>, vector<32x8xbf16>
    %144 = arith.truncf %135 : vector<8x256xf32> to vector<8x256xbf16>
    %cst_40 = arith.constant dense<0.000000e+00> : vector<32x256xf32>
    %145 = tpu.matmul %143, %144, %cst_40 {dimension_numbers = #tpu.dot_dimension_numbers<[1], [0], [0], [1], [0, 0, 1, 1], [], []>} : vector<32x8xbf16>, vector<8x256xbf16>, vector<32x256xf32> -> vector<32x256xf32>
    %146 = arith.addf %142, %145 : vector<32x256xf32>
    %147 = arith.addf %146, %22 : vector<32x256xf32>
    %cst_41 = arith.constant dense<0.000000e+00> : vector<32xf32>
    %148 = vector.multi_reduction <add>, %147, %cst_41 [1] : vector<32x256xf32> to vector<32xf32>
    %149 = vector.shape_cast %148 : vector<32xf32> to vector<32x1xf32>
    %cst_42 = arith.constant 3.906250e-03 : f32
    %150 = vector.broadcast %cst_42 : f32 to vector<32x1xf32>
    %151 = arith.mulf %149, %150 : vector<32x1xf32>
    %c0_43 = arith.constant 0 : index
    %c0_44 = arith.constant 0 : index
    %152 = vector.load %arg7[%c0_43, %c0_44] : memref<32x8xf32, #tpu.memory_space<vmem>>, vector<32x8xf32>
    %153 = vector.broadcast %151 : vector<32x1xf32> to vector<32x8xf32>
    %154 = arith.mulf %152, %153 : vector<32x8xf32>
    %cst_45 = arith.constant dense<0.000000e+00> : vector<8xf32>
    %155 = vector.multi_reduction <add>, %154, %cst_45 [0] : vector<32x8xf32> to vector<8xf32>
    %156 = vector.shape_cast %155 : vector<8xf32> to vector<1x8xf32>
    %cst_46 = arith.constant 0.000000e+00 : f32
    %157 = vector.broadcast %cst_46 : f32 to vector<1x8xf32>
    %158 = arith.maximumf %156, %157 : vector<1x8xf32>
    %c0_47 = arith.constant 0 : index
    %c0_48 = arith.constant 0 : index
    %159 = vector.load %arg8[%c0_47, %c0_48] : memref<32x8xf32, #tpu.memory_space<vmem>>, vector<32x8xf32>
    %160 = vector.broadcast %158 : vector<1x8xf32> to vector<32x8xf32>
    %161 = arith.mulf %159, %160 : vector<32x8xf32>
    %cst_49 = arith.constant dense<0.000000e+00> : vector<32xf32>
    %162 = vector.multi_reduction <add>, %161, %cst_49 [1] : vector<32x8xf32> to vector<32xf32>
    %163 = vector.shape_cast %162 : vector<32xf32> to vector<32x1xf32>
    %164 = arith.negf %163 : vector<32x1xf32>
    %165 = math.exp %164 : vector<32x1xf32>
    %cst_50 = arith.constant 1.000000e+00 : f32
    %166 = vector.broadcast %cst_50 : f32 to vector<32x1xf32>
    %167 = arith.addf %166, %165 : vector<32x1xf32>
    %168 = arith.divf %166, %167 : vector<32x1xf32>
    %169 = vector.broadcast %168 : vector<32x1xf32> to vector<32x256xf32>
    %170 = arith.mulf %147, %169 : vector<32x256xf32>
    %c0_51 = arith.constant 0 : index
    %c0_52 = arith.constant 0 : index
    %c0_53 = arith.constant 0 : index
    %171 = vector.load %arg9[%c0_51, %c0_52, %c0_53] : memref<2x32x256xf32, #tpu.memory_space<vmem>>, vector<1x32x256xf32>
    %172 = vector.shape_cast %171 : vector<1x32x256xf32> to vector<32x256xf32>
    %173 = vector.shape_cast %170 : vector<32x256xf32> to vector<1x32x256xf32>
    tpu.vector_store %arg9[%c0_51, %c0_52, %c0_53], %173 {strides = array<i32>} : memref<2x32x256xf32, #tpu.memory_space<vmem>>, vector<1x32x256xf32>,
    %c1 = arith.constant 1 : index
    %c0_54 = arith.constant 0 : index
    %c0_55 = arith.constant 0 : index
    %174 = vector.load %arg1[%c1, %c0_54, %c0_55] : memref<2x32x256xf32, #tpu.memory_space<vmem>>, vector<1x32x256xf32>
    %175 = vector.shape_cast %174 : vector<1x32x256xf32> to vector<32x256xf32>
    %c0_56 = arith.constant 0 : index
    %c0_57 = arith.constant 0 : index
    %176 = vector.load %arg2[%c0_56, %c0_57] : memref<8x32xbf16, #tpu.memory_space<vmem>>, vector<8x32xbf16>
    %177 = arith.truncf %175 : vector<32x256xf32> to vector<32x256xbf16>
    %cst_58 = arith.constant dense<0.000000e+00> : vector<8x256xf32>
    %178 = tpu.matmul %176, %177, %cst_58 {dimension_numbers = #tpu.dot_dimension_numbers<[1], [0], [0], [1], [0, 0, 1, 1], [], []>} : vector<8x32xbf16>, vector<32x256xbf16>, vector<8x256xf32> -> vector<8x256xf32>
    %179 = arith.truncf %178 : vector<8x256xf32> to vector<8x256xbf16>
    %cst_59 = arith.constant 0.000000e+00 : bf16
    %180 = vector.broadcast %cst_59 : bf16 to vector<8x1xbf16>
    %181 = vector.extract_strided_slice %179 {offsets = [0, 0], sizes = [8, 255], strides = [1, 1]} : vector<8x256xbf16> to vector<8x255xbf16>
    %182 = tpu.concatenate %180, %181 in 1 : vector<8x1xbf16>, vector<8x255xbf16> -> vector<8x256xbf16>
    %c0_i32_60 = arith.constant 0 : i32
    %183 = arith.sitofp %c0_i32_60 : i32 to bf16
    %184 = vector.broadcast %183 : bf16 to vector<8x256xbf16>
    %185 = arith.select %18, %182, %184 : vector<8x256xi1>, vector<8x256xbf16>
    %186 = vector.extract_strided_slice %179 {offsets = [0, 1], sizes = [8, 255], strides = [1, 1]} : vector<8x256xbf16> to vector<8x255xbf16>
    %187 = tpu.concatenate %186, %180 in 1 : vector<8x255xbf16>, vector<8x1xbf16> -> vector<8x256xbf16>
    %c0_i32_61 = arith.constant 0 : i32
    %188 = arith.sitofp %c0_i32_61 : i32 to bf16
    %189 = vector.broadcast %188 : bf16 to vector<8x256xbf16>
    %190 = arith.select %20, %187, %189 : vector<8x256xi1>, vector<8x256xbf16>
    %cst_62 = arith.constant 0.000000e+00 : bf16
    %191 = vector.broadcast %cst_62 : bf16 to vector<8x16xbf16>
    %192 = tpu.concatenate %191, %185, %191 in 1 : vector<8x16xbf16>, vector<8x256xbf16>, vector<8x16xbf16> -> vector<8x288xbf16>
    %193 = tpu.concatenate %191, %179, %191 in 1 : vector<8x16xbf16>, vector<8x256xbf16>, vector<8x16xbf16> -> vector<8x288xbf16>
    %194 = tpu.concatenate %191, %190, %191 in 1 : vector<8x16xbf16>, vector<8x256xbf16>, vector<8x16xbf16> -> vector<8x288xbf16>
    %195 = vector.extract_strided_slice %192 {offsets = [0, 0], sizes = [8, 256], strides = [1, 1]} : vector<8x288xbf16> to vector<8x256xbf16>
    %196 = vector.extract_strided_slice %193 {offsets = [0, 0], sizes = [8, 256], strides = [1, 1]} : vector<8x288xbf16> to vector<8x256xbf16>
    %197 = vector.extract_strided_slice %194 {offsets = [0, 0], sizes = [8, 256], strides = [1, 1]} : vector<8x288xbf16> to vector<8x256xbf16>
    %198 = vector.extract_strided_slice %192 {offsets = [0, 32], sizes = [8, 256], strides = [1, 1]} : vector<8x288xbf16> to vector<8x256xbf16>
    %199 = vector.extract_strided_slice %193 {offsets = [0, 32], sizes = [8, 256], strides = [1, 1]} : vector<8x288xbf16> to vector<8x256xbf16>
    %200 = vector.extract_strided_slice %194 {offsets = [0, 32], sizes = [8, 256], strides = [1, 1]} : vector<8x288xbf16> to vector<8x256xbf16>
    %201 = tpu.concatenate %195, %196, %197, %185, %179, %190, %198, %199, %200 in 0 : vector<8x256xbf16>, vector<8x256xbf16>, vector<8x256xbf16>, vector<8x256xbf16>, vector<8x256xbf16>, vector<8x256xbf16>, vector<8x256xbf16>, vector<8x256xbf16>, vector<8x256xbf16> -> vector<72x256xbf16>
    %c0_63 = arith.constant 0 : index
    %c0_64 = arith.constant 0 : index
    %202 = vector.load %arg3[%c0_63, %c0_64] : memref<8x72xbf16, #tpu.memory_space<vmem>>, vector<8x72xbf16>
    %cst_65 = arith.constant dense<0.000000e+00> : vector<8x256xf32>
    %203 = tpu.matmul %202, %201, %cst_65 {dimension_numbers = #tpu.dot_dimension_numbers<[1], [0], [0], [1], [0, 0, 1, 1], [], []>} : vector<8x72xbf16>, vector<72x256xbf16>, vector<8x256xf32> -> vector<8x256xf32>
    %204 = arith.truncf %203 : vector<8x256xf32> to vector<8x256xbf16>
    %cst_66 = arith.constant 0.000000e+00 : bf16
    %205 = vector.broadcast %cst_66 : bf16 to vector<8x1xbf16>
    %206 = vector.extract_strided_slice %204 {offsets = [0, 0], sizes = [8, 255], strides = [1, 1]} : vector<8x256xbf16> to vector<8x255xbf16>
    %207 = tpu.concatenate %205, %206 in 1 : vector<8x1xbf16>, vector<8x255xbf16> -> vector<8x256xbf16>
    %c0_i32_67 = arith.constant 0 : i32
    %208 = arith.sitofp %c0_i32_67 : i32 to bf16
    %209 = vector.broadcast %208 : bf16 to vector<8x256xbf16>
    %210 = arith.select %18, %207, %209 : vector<8x256xi1>, vector<8x256xbf16>
    %211 = vector.extract_strided_slice %204 {offsets = [0, 1], sizes = [8, 255], strides = [1, 1]} : vector<8x256xbf16> to vector<8x255xbf16>
    %212 = tpu.concatenate %211, %205 in 1 : vector<8x255xbf16>, vector<8x1xbf16> -> vector<8x256xbf16>
    %c0_i32_68 = arith.constant 0 : i32
    %213 = arith.sitofp %c0_i32_68 : i32 to bf16
    %214 = vector.broadcast %213 : bf16 to vector<8x256xbf16>
    %215 = arith.select %20, %212, %214 : vector<8x256xi1>, vector<8x256xbf16>
    %cst_69 = arith.constant 0.000000e+00 : bf16
    %216 = vector.broadcast %cst_69 : bf16 to vector<8x16xbf16>
    %217 = tpu.concatenate %216, %210, %216 in 1 : vector<8x16xbf16>, vector<8x256xbf16>, vector<8x16xbf16> -> vector<8x288xbf16>
    %218 = tpu.concatenate %216, %204, %216 in 1 : vector<8x16xbf16>, vector<8x256xbf16>, vector<8x16xbf16> -> vector<8x288xbf16>
    %219 = tpu.concatenate %216, %215, %216 in 1 : vector<8x16xbf16>, vector<8x256xbf16>, vector<8x16xbf16> -> vector<8x288xbf16>
    %220 = vector.extract_strided_slice %217 {offsets = [0, 0], sizes = [8, 256], strides = [1, 1]} : vector<8x288xbf16> to vector<8x256xbf16>
    %221 = vector.extract_strided_slice %218 {offsets = [0, 0], sizes = [8, 256], strides = [1, 1]} : vector<8x288xbf16> to vector<8x256xbf16>
    %222 = vector.extract_strided_slice %219 {offsets = [0, 0], sizes = [8, 256], strides = [1, 1]} : vector<8x288xbf16> to vector<8x256xbf16>
    %223 = vector.extract_strided_slice %217 {offsets = [0, 32], sizes = [8, 256], strides = [1, 1]} : vector<8x288xbf16> to vector<8x256xbf16>
    %224 = vector.extract_strided_slice %218 {offsets = [0, 32], sizes = [8, 256], strides = [1, 1]} : vector<8x288xbf16> to vector<8x256xbf16>
    %225 = vector.extract_strided_slice %219 {offsets = [0, 32], sizes = [8, 256], strides = [1, 1]} : vector<8x288xbf16> to vector<8x256xbf16>
    %226 = tpu.concatenate %220, %221, %222, %210, %204, %215, %223, %224, %225 in 0 : vector<8x256xbf16>, vector<8x256xbf16>, vector<8x256xbf16>, vector<8x256xbf16>, vector<8x256xbf16>, vector<8x256xbf16>, vector<8x256xbf16>, vector<8x256xbf16>, vector<8x256xbf16> -> vector<72x256xbf16>
    %c0_70 = arith.constant 0 : index
    %c0_71 = arith.constant 0 : index
    %227 = vector.load %arg4[%c0_70, %c0_71] : memref<8x72xbf16, #tpu.memory_space<vmem>>, vector<8x72xbf16>
    %cst_72 = arith.constant dense<0.000000e+00> : vector<8x256xf32>
    %228 = tpu.matmul %227, %226, %cst_72 {dimension_numbers = #tpu.dot_dimension_numbers<[1], [0], [0], [1], [0, 0, 1, 1], [], []>} : vector<8x72xbf16>, vector<72x256xbf16>, vector<8x256xf32> -> vector<8x256xf32>
    %229 = arith.truncf %178 : vector<8x256xf32> to vector<8x256xbf16>
    %cst_73 = arith.constant 0.000000e+00 : bf16
    %230 = vector.broadcast %cst_73 : bf16 to vector<8x1xbf16>
    %231 = vector.extract_strided_slice %229 {offsets = [0, 0], sizes = [8, 255], strides = [1, 1]} : vector<8x256xbf16> to vector<8x255xbf16>
    %232 = tpu.concatenate %230, %231 in 1 : vector<8x1xbf16>, vector<8x255xbf16> -> vector<8x256xbf16>
    %c0_i32_74 = arith.constant 0 : i32
    %233 = arith.sitofp %c0_i32_74 : i32 to bf16
    %234 = vector.broadcast %233 : bf16 to vector<8x256xbf16>
    %235 = arith.select %18, %232, %234 : vector<8x256xi1>, vector<8x256xbf16>
    %236 = vector.extract_strided_slice %229 {offsets = [0, 1], sizes = [8, 255], strides = [1, 1]} : vector<8x256xbf16> to vector<8x255xbf16>
    %237 = tpu.concatenate %236, %230 in 1 : vector<8x255xbf16>, vector<8x1xbf16> -> vector<8x256xbf16>
    %c0_i32_75 = arith.constant 0 : i32
    %238 = arith.sitofp %c0_i32_75 : i32 to bf16
    %239 = vector.broadcast %238 : bf16 to vector<8x256xbf16>
    %240 = arith.select %20, %237, %239 : vector<8x256xi1>, vector<8x256xbf16>
    %cst_76 = arith.constant 0.000000e+00 : bf16
    %241 = vector.broadcast %cst_76 : bf16 to vector<8x16xbf16>
    %242 = tpu.concatenate %241, %235, %241 in 1 : vector<8x16xbf16>, vector<8x256xbf16>, vector<8x16xbf16> -> vector<8x288xbf16>
    %243 = tpu.concatenate %241, %229, %241 in 1 : vector<8x16xbf16>, vector<8x256xbf16>, vector<8x16xbf16> -> vector<8x288xbf16>
    %244 = tpu.concatenate %241, %240, %241 in 1 : vector<8x16xbf16>, vector<8x256xbf16>, vector<8x16xbf16> -> vector<8x288xbf16>
    %245 = vector.extract_strided_slice %242 {offsets = [0, 0], sizes = [8, 256], strides = [1, 1]} : vector<8x288xbf16> to vector<8x256xbf16>
    %246 = vector.extract_strided_slice %243 {offsets = [0, 0], sizes = [8, 256], strides = [1, 1]} : vector<8x288xbf16> to vector<8x256xbf16>
    %247 = vector.extract_strided_slice %244 {offsets = [0, 0], sizes = [8, 256], strides = [1, 1]} : vector<8x288xbf16> to vector<8x256xbf16>
    %248 = vector.extract_strided_slice %242 {offsets = [0, 32], sizes = [8, 256], strides = [1, 1]} : vector<8x288xbf16> to vector<8x256xbf16>
    %249 = vector.extract_strided_slice %243 {offsets = [0, 32], sizes = [8, 256], strides = [1, 1]} : vector<8x288xbf16> to vector<8x256xbf16>
    %250 = vector.extract_strided_slice %244 {offsets = [0, 32], sizes = [8, 256], strides = [1, 1]} : vector<8x288xbf16> to vector<8x256xbf16>
    %251 = arith.addf %245, %246 : vector<8x256xbf16>
    %252 = arith.addf %251, %247 : vector<8x256xbf16>
    %253 = arith.extf %252 : vector<8x256xbf16> to vector<8x256xf32>
    %254 = arith.addf %235, %229 : vector<8x256xbf16>
    %255 = arith.addf %254, %240 : vector<8x256xbf16>
    %256 = arith.extf %255 : vector<8x256xbf16> to vector<8x256xf32>
    %257 = arith.addf %253, %256 : vector<8x256xf32>
    %258 = arith.addf %248, %249 : vector<8x256xbf16>
    %259 = arith.addf %258, %250 : vector<8x256xbf16>
    %260 = arith.extf %259 : vector<8x256xbf16> to vector<8x256xf32>
    %261 = arith.addf %257, %260 : vector<8x256xf32>
    %cst_77 = arith.constant 0.111111112 : f32
    %262 = vector.broadcast %cst_77 : f32 to vector<8x256xf32>
    %263 = arith.mulf %261, %262 : vector<8x256xf32>
    %264 = arith.truncf %263 : vector<8x256xf32> to vector<8x256xbf16>
    %cst_78 = arith.constant 0.000000e+00 : bf16
    %265 = vector.broadcast %cst_78 : bf16 to vector<8x1xbf16>
    %266 = vector.extract_strided_slice %264 {offsets = [0, 0], sizes = [8, 255], strides = [1, 1]} : vector<8x256xbf16> to vector<8x255xbf16>
    %267 = tpu.concatenate %265, %266 in 1 : vector<8x1xbf16>, vector<8x255xbf16> -> vector<8x256xbf16>
    %c0_i32_79 = arith.constant 0 : i32
    %268 = arith.sitofp %c0_i32_79 : i32 to bf16
    %269 = vector.broadcast %268 : bf16 to vector<8x256xbf16>
    %270 = arith.select %18, %267, %269 : vector<8x256xi1>, vector<8x256xbf16>
    %271 = vector.extract_strided_slice %264 {offsets = [0, 1], sizes = [8, 255], strides = [1, 1]} : vector<8x256xbf16> to vector<8x255xbf16>
    %272 = tpu.concatenate %271, %265 in 1 : vector<8x255xbf16>, vector<8x1xbf16> -> vector<8x256xbf16>
    %c0_i32_80 = arith.constant 0 : i32
    %273 = arith.sitofp %c0_i32_80 : i32 to bf16
    %274 = vector.broadcast %273 : bf16 to vector<8x256xbf16>
    %275 = arith.select %20, %272, %274 : vector<8x256xi1>, vector<8x256xbf16>
    %cst_81 = arith.constant 0.000000e+00 : bf16
    %276 = vector.broadcast %cst_81 : bf16 to vector<8x16xbf16>
    %277 = tpu.concatenate %276, %270, %276 in 1 : vector<8x16xbf16>, vector<8x256xbf16>, vector<8x16xbf16> -> vector<8x288xbf16>
    %278 = tpu.concatenate %276, %264, %276 in 1 : vector<8x16xbf16>, vector<8x256xbf16>, vector<8x16xbf16> -> vector<8x288xbf16>
    %279 = tpu.concatenate %276, %275, %276 in 1 : vector<8x16xbf16>, vector<8x256xbf16>, vector<8x16xbf16> -> vector<8x288xbf16>
    %280 = vector.extract_strided_slice %277 {offsets = [0, 0], sizes = [8, 256], strides = [1, 1]} : vector<8x288xbf16> to vector<8x256xbf16>
    %281 = vector.extract_strided_slice %278 {offsets = [0, 0], sizes = [8, 256], strides = [1, 1]} : vector<8x288xbf16> to vector<8x256xbf16>
    %282 = vector.extract_strided_slice %279 {offsets = [0, 0], sizes = [8, 256], strides = [1, 1]} : vector<8x288xbf16> to vector<8x256xbf16>
    %283 = vector.extract_strided_slice %277 {offsets = [0, 32], sizes = [8, 256], strides = [1, 1]} : vector<8x288xbf16> to vector<8x256xbf16>
    %284 = vector.extract_strided_slice %278 {offsets = [0, 32], sizes = [8, 256], strides = [1, 1]} : vector<8x288xbf16> to vector<8x256xbf16>
    %285 = vector.extract_strided_slice %279 {offsets = [0, 32], sizes = [8, 256], strides = [1, 1]} : vector<8x288xbf16> to vector<8x256xbf16>
    %286 = tpu.concatenate %280, %281, %282, %270, %264, %275, %283, %284, %285 in 0 : vector<8x256xbf16>, vector<8x256xbf16>, vector<8x256xbf16>, vector<8x256xbf16>, vector<8x256xbf16>, vector<8x256xbf16>, vector<8x256xbf16>, vector<8x256xbf16>, vector<8x256xbf16> -> vector<72x256xbf16>
    %c0_82 = arith.constant 0 : index
    %c0_83 = arith.constant 0 : index
    %287 = vector.load %arg5[%c0_82, %c0_83] : memref<8x72xbf16, #tpu.memory_space<vmem>>, vector<8x72xbf16>
    %cst_84 = arith.constant dense<0.000000e+00> : vector<8x256xf32>
    %288 = tpu.matmul %287, %286, %cst_84 {dimension_numbers = #tpu.dot_dimension_numbers<[1], [0], [0], [1], [0, 0, 1, 1], [], []>} : vector<8x72xbf16>, vector<72x256xbf16>, vector<8x256xf32> -> vector<8x256xf32>
    %c0_85 = arith.constant 0 : index
    %c0_86 = arith.constant 0 : index
    %289 = vector.load %arg6[%c0_85, %c0_86] : memref<32x24xbf16, #tpu.memory_space<vmem>>, vector<32x8xbf16>
    %290 = arith.truncf %263 : vector<8x256xf32> to vector<8x256xbf16>
    %cst_87 = arith.constant dense<0.000000e+00> : vector<32x256xf32>
    %291 = tpu.matmul %289, %290, %cst_87 {dimension_numbers = #tpu.dot_dimension_numbers<[1], [0], [0], [1], [0, 0, 1, 1], [], []>} : vector<32x8xbf16>, vector<8x256xbf16>, vector<32x256xf32> -> vector<32x256xf32>
    %c0_88 = arith.constant 0 : index
    %c8_89 = arith.constant 8 : index
    %292 = vector.load %arg6[%c0_88, %c8_89] : memref<32x24xbf16, #tpu.memory_space<vmem>>, vector<32x8xbf16>
    %293 = arith.truncf %228 : vector<8x256xf32> to vector<8x256xbf16>
    %cst_90 = arith.constant dense<0.000000e+00> : vector<32x256xf32>
    %294 = tpu.matmul %292, %293, %cst_90 {dimension_numbers = #tpu.dot_dimension_numbers<[1], [0], [0], [1], [0, 0, 1, 1], [], []>} : vector<32x8xbf16>, vector<8x256xbf16>, vector<32x256xf32> -> vector<32x256xf32>
    %295 = arith.addf %291, %294 : vector<32x256xf32>
    %c0_91 = arith.constant 0 : index
    %c16_92 = arith.constant 16 : index
    %296 = vector.load %arg6[%c0_91, %c16_92] : memref<32x24xbf16, #tpu.memory_space<vmem>>, vector<32x8xbf16>
    %297 = arith.truncf %288 : vector<8x256xf32> to vector<8x256xbf16>
    %cst_93 = arith.constant dense<0.000000e+00> : vector<32x256xf32>
    %298 = tpu.matmul %296, %297, %cst_93 {dimension_numbers = #tpu.dot_dimension_numbers<[1], [0], [0], [1], [0, 0, 1, 1], [], []>} : vector<32x8xbf16>, vector<8x256xbf16>, vector<32x256xf32> -> vector<32x256xf32>
    %299 = arith.addf %295, %298 : vector<32x256xf32>
    %300 = arith.addf %299, %175 : vector<32x256xf32>
    %cst_94 = arith.constant dense<0.000000e+00> : vector<32xf32>
    %301 = vector.multi_reduction <add>, %300, %cst_94 [1] : vector<32x256xf32> to vector<32xf32>
    %302 = vector.shape_cast %301 : vector<32xf32> to vector<32x1xf32>
    %cst_95 = arith.constant 3.906250e-03 : f32
    %303 = vector.broadcast %cst_95 : f32 to vector<32x1xf32>
    %304 = arith.mulf %302, %303 : vector<32x1xf32>
    %c0_96 = arith.constant 0 : index
    %c0_97 = arith.constant 0 : index
    %305 = vector.load %arg7[%c0_96, %c0_97] : memref<32x8xf32, #tpu.memory_space<vmem>>, vector<32x8xf32>
    %306 = vector.broadcast %304 : vector<32x1xf32> to vector<32x8xf32>
    %307 = arith.mulf %305, %306 : vector<32x8xf32>
    %cst_98 = arith.constant dense<0.000000e+00> : vector<8xf32>
    %308 = vector.multi_reduction <add>, %307, %cst_98 [0] : vector<32x8xf32> to vector<8xf32>
    %309 = vector.shape_cast %308 : vector<8xf32> to vector<1x8xf32>
    %cst_99 = arith.constant 0.000000e+00 : f32
    %310 = vector.broadcast %cst_99 : f32 to vector<1x8xf32>
    %311 = arith.maximumf %309, %310 : vector<1x8xf32>
    %c0_100 = arith.constant 0 : index
    %c0_101 = arith.constant 0 : index
    %312 = vector.load %arg8[%c0_100, %c0_101] : memref<32x8xf32, #tpu.memory_space<vmem>>, vector<32x8xf32>
    %313 = vector.broadcast %311 : vector<1x8xf32> to vector<32x8xf32>
    %314 = arith.mulf %312, %313 : vector<32x8xf32>
    %cst_102 = arith.constant dense<0.000000e+00> : vector<32xf32>
    %315 = vector.multi_reduction <add>, %314, %cst_102 [1] : vector<32x8xf32> to vector<32xf32>
    %316 = vector.shape_cast %315 : vector<32xf32> to vector<32x1xf32>
    %317 = arith.negf %316 : vector<32x1xf32>
    %318 = math.exp %317 : vector<32x1xf32>
    %cst_103 = arith.constant 1.000000e+00 : f32
    %319 = vector.broadcast %cst_103 : f32 to vector<32x1xf32>
    %320 = arith.addf %319, %318 : vector<32x1xf32>
    %321 = arith.divf %319, %320 : vector<32x1xf32>
    %322 = vector.broadcast %321 : vector<32x1xf32> to vector<32x256xf32>
    %323 = arith.mulf %300, %322 : vector<32x256xf32>
    %c1_104 = arith.constant 1 : index
    %c0_105 = arith.constant 0 : index
    %c0_106 = arith.constant 0 : index
    %324 = vector.load %arg9[%c1_104, %c0_105, %c0_106] : memref<2x32x256xf32, #tpu.memory_space<vmem>>, vector<1x32x256xf32>
    %325 = vector.shape_cast %324 : vector<1x32x256xf32> to vector<32x256xf32>
    %326 = vector.shape_cast %323 : vector<32x256xf32> to vector<1x32x256xf32>
    tpu.vector_store %arg9[%c1_104, %c0_105, %c0_106], %326 {strides = array<i32>} : memref<2x32x256xf32, #tpu.memory_space<vmem>>, vector<1x32x256xf32>,
    return
  }
  func.func @transform_0(%arg0: i32) -> (i32, i32, i32) {
    %c0_i32 = arith.constant 0 : i32
    %c0_i32_0 = arith.constant 0 : i32
    %c0_i32_1 = arith.constant 0 : i32
    return %arg0, %c0_i32, %c0_i32_0 : i32, i32, i32
  }
  func.func @transform_1(%arg0: i32) -> (i32, i32) {
    %c0_i32 = arith.constant 0 : i32
    %c0_i32_0 = arith.constant 0 : i32
    %c0_i32_1 = arith.constant 0 : i32
    return %c0_i32, %c0_i32_0 : i32, i32
  }
  func.func @transform_2(%arg0: i32) -> (i32, i32) {
    %c0_i32 = arith.constant 0 : i32
    %c0_i32_0 = arith.constant 0 : i32
    %c0_i32_1 = arith.constant 0 : i32
    return %c0_i32, %c0_i32_0 : i32, i32
  }
  func.func @transform_3(%arg0: i32) -> (i32, i32) {
    %c0_i32 = arith.constant 0 : i32
    %c0_i32_0 = arith.constant 0 : i32
    %c0_i32_1 = arith.constant 0 : i32
    return %c0_i32, %c0_i32_0 : i32, i32
  }
  func.func @transform_4(%arg0: i32) -> (i32, i32) {
    %c0_i32 = arith.constant 0 : i32
    %c0_i32_0 = arith.constant 0 : i32
    %c0_i32_1 = arith.constant 0 : i32
    return %c0_i32, %c0_i32_0 : i32, i32
  }
  func.func @transform_5(%arg0: i32) -> (i32, i32) {
    %c0_i32 = arith.constant 0 : i32
    %c0_i32_0 = arith.constant 0 : i32
    %c0_i32_1 = arith.constant 0 : i32
    return %c0_i32, %c0_i32_0 : i32, i32
  }
  func.func @transform_6(%arg0: i32) -> (i32, i32) {
    %c0_i32 = arith.constant 0 : i32
    %c0_i32_0 = arith.constant 0 : i32
    %c0_i32_1 = arith.constant 0 : i32
    return %c0_i32, %c0_i32_0 : i32, i32
  }
  func.func @transform_7(%arg0: i32) -> (i32, i32) {
    %c0_i32 = arith.constant 0 : i32
    %c0_i32_0 = arith.constant 0 : i32
    %c0_i32_1 = arith.constant 0 : i32
    return %c0_i32, %c0_i32_0 : i32, i32
  }
  func.func @transform_8(%arg0: i32) -> (i32, i32, i32) {
    %c0_i32 = arith.constant 0 : i32
    %c0_i32_0 = arith.constant 0 : i32
    %c0_i32_1 = arith.constant 0 : i32
    return %arg0, %c0_i32, %c0_i32_0 : i32, i32, i32
  }
}

</mosaic_0001>

<llo_original>
// kernel: tpu_custom_call.1
$region0: #{tpu_custom_call.1}
  #allocation0 [shape = 'u32[]', space=smem, size = 0x4, offset = 0x4, fixed_abs, tag = 'smem constant byte address 0x4 - core index']
  #allocation1 [shape = 'u32[144,128]{1,0:T(1,128)}', space=vmem, size = 0x12000, scoped, tag = 'internal scratch']
  %s0 = inlined_call_operand.hbm [shape: f32[2,32,256], index: 0, kind: input, shape index: {}]
  %s1 = inlined_call_operand.vmem [shape: bf16[8,32], index: 1, kind: input, shape index: {}]
  %s2 = inlined_call_operand.vmem [shape: bf16[8,72], index: 2, kind: input, shape index: {}]
  %s3 = inlined_call_operand.vmem [shape: bf16[8,72], index: 3, kind: input, shape index: {}]
  %s4 = inlined_call_operand.vmem [shape: bf16[8,72], index: 4, kind: input, shape index: {}]
  %s5 = inlined_call_operand.vmem [shape: bf16[32,24], index: 5, kind: input, shape index: {}]
  %s6 = inlined_call_operand.vmem [shape: f32[32,8], index: 6, kind: input, shape index: {}]
  %s7 = inlined_call_operand.vmem [shape: f32[32,8], index: 7, kind: input, shape index: {}]
  %s8 = inlined_call_operand.hbm [shape: f32[2,32,256], index: 8, kind: output, shape index: {}]
  %s9 = sld [smem:[#allocation0]]
  $region46: #{tpu_custom_call.1} parent=0
    _
  %s11 = ssub.s32 1, %s9
  %s12 = scalar_select 0, %s11, %s9
  $region1: #{tpu_custom_call.1} parent=0
    #allocation2 [shape = 'u8[65536]{0}', space=vmem, size = 0x10000, scoped, tag = 'input window, operand 0, single buffered']
    #allocation3 [shape = 's32[1]{0}', space=sflag, size = 0x4, scoped, tag = 'scoped memory for tpu_custom_call.1']
    #allocation4 [shape = 's32[1]{0}', space=sflag, size = 0x4, scoped, tag = 'scoped memory for tpu_custom_call.1']
    #allocation5 [shape = 'u8[65536]{0}', space=vmem, size = 0x10000, scoped, tag = 'output window, operand 0, single buffered']
    %13 = vsyncpa [#allocation3], 0
    %14 = vsyncpa [#allocation4], 0
    // Predicated region
    $region2: #{tpu_custom_call.1} parent=1 // pred_check
      _
    $region3: #{tpu_custom_call.1} parent=1 // pred_check_branch
      %16 = sbr.rel (0) target = $region5
    $region4: #{tpu_custom_call.1} parent=1 // pred_region
      %s18 = ssub.s32 2048, 2048
      %19 = vsyncadd [#allocation3], %s18
      %s20 = sshll.u32 [#allocation2], 4
      %s21 = int_to_ptr.vmem [resolvable:$true] %s20
      %26 = dma.hbm_to_vmem [thread:$0]  %s0, 2048, %s21, [#allocation3], 256, 256, 16
    $region5: #{tpu_custom_call.1} parent=1 // pred_fallthru
      _
    // Predicated region
    $region6: #{tpu_custom_call.1} parent=1 // pred_check
      _
    $region7: #{tpu_custom_call.1} parent=1 // pred_check_branch
      %28 = sbr.rel (0) target = $region9
    $region8: #{tpu_custom_call.1} parent=1 // pred_region
      _
    $region9: #{tpu_custom_call.1} parent=1 // pred_fallthru
      _
    // Predicated region
    $region10: #{tpu_custom_call.1} parent=1 // pred_check
      _
    $region11: #{tpu_custom_call.1} parent=1 // pred_check_branch
      %30 = sbr.rel (0) target = $region13
    $region12: #{tpu_custom_call.1} parent=1 // pred_region
      _
    $region13: #{tpu_custom_call.1} parent=1 // pred_fallthru
      _
    // Predicated region
    $region14: #{tpu_custom_call.1} parent=1 // pred_check
      _
    $region15: #{tpu_custom_call.1} parent=1 // pred_check_branch
      %32 = sbr.rel (0) target = $region17
    $region16: #{tpu_custom_call.1} parent=1 // pred_region
      _
    $region17: #{tpu_custom_call.1} parent=1 // pred_fallthru
      _
    // Predicated region
    $region18: #{tpu_custom_call.1} parent=1 // pred_check
      _
    $region19: #{tpu_custom_call.1} parent=1 // pred_check_branch
      %34 = sbr.rel (0) target = $region21
    $region20: #{tpu_custom_call.1} parent=1 // pred_region
      _
    $region21: #{tpu_custom_call.1} parent=1 // pred_fallthru
      _
    // Predicated region
    $region22: #{tpu_custom_call.1} parent=1 // pred_check
      _
    $region23: #{tpu_custom_call.1} parent=1 // pred_check_branch
      %36 = sbr.rel (0) target = $region25
    $region24: #{tpu_custom_call.1} parent=1 // pred_region
      _
    $region25: #{tpu_custom_call.1} parent=1 // pred_fallthru
      _
    // Predicated region
    $region26: #{tpu_custom_call.1} parent=1 // pred_check
      _
    $region27: #{tpu_custom_call.1} parent=1 // pred_check_branch
      %38 = sbr.rel (0) target = $region29
    $region28: #{tpu_custom_call.1} parent=1 // pred_region
      _
    $region29: #{tpu_custom_call.1} parent=1 // pred_fallthru
      _
    // Predicated region
    $region30: #{tpu_custom_call.1} parent=1 // pred_check
      _
    $region31: #{tpu_custom_call.1} parent=1 // pred_check_branch
      %40 = sbr.rel (0) target = $region33
    $region32: #{tpu_custom_call.1} parent=1 // pred_region
      _
    $region33: #{tpu_custom_call.1} parent=1 // pred_fallthru
      _
    // Predicated region
    $region34: #{tpu_custom_call.1} parent=1 // pred_check
      _
    $region35: #{tpu_custom_call.1} parent=1 // pred_check_branch
      %42 = sbr.rel (0) target = $region37
    $region36: #{tpu_custom_call.1} parent=1 // pred_region
      %43 = dma.done [#allocation3], 2048
    $region37: #{tpu_custom_call.1} parent=1 // pred_fallthru
      _
    %v47 = vlaneseq
    %v48 = vand.u32 %v47, 127
    %v49 = vadd.s32 %v48, 128
    %vm50 = vcmp.lt.s32.totalorder %v48, 0
    %v51 = vsub.s32 0, %v48
    %v52 = vsel %vm50, %v51, %v48
    %v53 = vshrl.u32 %v52, 4
    %v54 = vand.u32 %v52, 15
    %v55 = vsub.s32 0, %v54
    %v56 = vsel %vm50, %v55, %v54
    %vm57 = vcmp.lt.s32.totalorder %v49, 0
    %v58 = vsub.s32 0, %v49
    %v59 = vsel %vm57, %v58, %v49
    %v60 = vshrl.u32 %v59, 4
    %v61 = vand.u32 %v59, 15
    %v62 = vsub.s32 0, %v61
    %v63 = vsel %vm57, %v62, %v61
    %vm64 = vcmp.ne.s32.totalorder %v56, 0
    %vm65 = vcmp.ne.s32.totalorder %v63, 0
    %vm66 = vcmp.lt.s32.totalorder %v56, 0
    %vm67 = vcmp.lt.s32.totalorder %v63, 0
    %vm68 = vmand %vm66, %vm64
    %vm69 = vmand %vm67, %vm65
    %v70 = vadd.s32 %v56, 16
    %v71 = vadd.s32 %v63, 16
    %v72 = vsel %vm68, %v70, %v56
    %v73 = vsel %vm69, %v71, %v63
    %vm74 = vcmp.ne.s32.totalorder %v72, 0
    %vm75 = vcmp.ne.s32.totalorder %v73, 0
    %vm76 = vcmp.ne.s32.totalorder %v72, 15
    %vm77 = vcmp.ne.s32.totalorder %v73, 15
    %v78 = vld [vmem:[#allocation2] sm:$0xff]
    %v79 = vld [vmem:[#allocation2 + $0x8] sm:$0xff]
    %v80 = vld [vmem:[#allocation2 + $0x10] sm:$0xff]
    %v81 = vld [vmem:[#allocation2 + $0x18] sm:$0xff]
    %v82 = vld [vmem:[#allocation2 + $0x20] sm:$0xff]
    %v83 = vld [vmem:[#allocation2 + $0x28] sm:$0xff]
    %v84 = vld [vmem:[#allocation2 + $0x30] sm:$0xff]
    %v85 = vld [vmem:[#allocation2 + $0x38] sm:$0xff]
    %v86 = vld [vmem:[%s1] sm:$0xf]
    %v87 = vpack.c.bf16 %v80, %v78
    %v88 = vpack.c.bf16 %v81, %v79
    %v89 = vpack.c.bf16 %v84, %v82
    %v90 = vpack.c.bf16 %v85, %v83
    %vm91 = vcmask 261120
    %v93 = vsel %vm91, %v86, 0
    %95 = vmatprep.subr.bf16.mxu0 0
    %96 = vmatpush1.bf16.msra.mxu0 0
    %97 = vmatprep.subr.bf16.mxu0 0
    %98 = vmatpush1.bf16.msra.mxu0 0
    %99 = vmatprep.subr.bf16.mxu0 0
    %100 = vmatpush1.bf16.msra.mxu0 0
    %101 = vmatprep.subr.bf16.mxu0 0
    %102 = vmatpush1.bf16.msra.mxu0 0
    %103 = vmatprep.subr.bf16.mxu0 0
    %104 = vmatpush1.bf16.msra.mxu0 0
    %105 = vmatprep.subr.bf16.mxu0 0
    %106 = vmatpush1.bf16.msra.mxu0 0
    %107 = vmatprep.subr.bf16.mxu0 %v90
    %108 = vmatpush1.bf16.msra.mxu0 %v89
    %109 = vmatprep.subr.bf16.mxu0 %v88
    %110 = vmatpush1.bf16.msra.mxu0 %v87
    %111 = vmatprep.subr.bf16.mxu0 0
    %112 = vmatpush2.bf16.msra.mxu0 0
    %113 = vmatprep.subr.bf16.mxu0 0
    %114 = vmatpush2.bf16.msra.mxu0 0
    %115 = vmatprep.subr.bf16.mxu0 0
    %116 = vmatpush2.bf16.msra.mxu0 0
    %117 = vmatprep.subr.bf16.mxu0 0
    %118 = vmatpush2.bf16.msra.mxu0 0
    %119 = vmatprep.subr.bf16.mxu0 0
    %120 = vmatpush2.bf16.msra.mxu0 0
    %121 = vmatprep.subr.bf16.mxu0 0
    %122 = vmatpush2.bf16.msra.mxu0 0
    %123 = vmatprep.subr.bf16.mxu0 0
    %124 = vmatpush2.bf16.msra.mxu0 0
    %125 = vmatprep.subr.bf16.mxu0 0
    %126 = vmatpush2.bf16.msra.mxu0 0
    %127 = vmatprep.mubr.bf16.mxu0 0
    %128 = vmatmul.mubr.bf16.gmra.mxu0 %v93
    %v129 = vpop.f32.mrf.mxu0
    %v130 = vadd.f32 0.0, %v129
    %v131 = vpop.f32.mrf.mxu0
    %v132 = vadd.f32 0.0, %v131
    %v133 = vpop.f32.mrf.mxu0
    %v134 = vpop.f32.mrf.mxu0
    %135 = vdwg.mxu0
    %v136 = vpack.c.bf16 %v130, %v130
    %v137 = vpack.c.bf16 %v132, %v132
    %140 = vrot.lane.b32.xlu0 %v136, 1
    %v141 = vpop.permute.xlu0 %140
    %142 = vrot.lane.b32.xlu0 %v137, 1
    %v143 = vpop.permute.xlu0 %142
    %vm144 = vcmask 7168
    %v145 = vsel %vm144, %v141, %v143
    %vm147 = vcmask 7168
    %v150 = vsel %vm147, 0, %v141
    %vm152 = vmpackc.low %vm75, %vm74
    %v153 = vsel %vm152, 65537, 0
    %v154 = vlaneseq
    %v155 = vshrl.u32 %v154, 7
    %v156 = vsub.s32 0, %v155
    %v157 = vrot.slane %v153, %v156
    %v158 = vlaneseq
    %v159 = vshrl.u32 %v158, 7
    %v160 = vsub.s32 4, %v159
    %v161 = vrot.slane %v153, %v160
    %vm162 = vcmp.ne.s16.totalorder %v157, 0
    %vm163 = vcmp.ne.s16.totalorder %v161, 0
    %v164 = vsel %vm162, %v150, 0
    %v165 = vsel %vm163, %v145, 0
    %166 = vrot.lane.b32.xlu0 %v136, 127
    %v167 = vpop.permute.xlu0 %166
    %168 = vrot.lane.b32.xlu0 %v137, 127
    %v169 = vpop.permute.xlu0 %168
    %vm170 = vcmask 1039360
    %v171 = vsel %vm170, %v167, %v169
    %vm173 = vcmask 1039360
    %v175 = vsel %vm173, %v169, 0
    %vm177 = vmpackc.low %vm77, %vm76
    %v178 = vsel %vm177, 65537, 0
    %v179 = vlaneseq
    %v180 = vshrl.u32 %v179, 7
    %v181 = vsub.s32 0, %v180
    %v182 = vrot.slane %v178, %v181
    %v183 = vlaneseq
    %v184 = vshrl.u32 %v183, 7
    %v185 = vsub.s32 4, %v184
    %v186 = vrot.slane %v178, %v185
    %vm187 = vcmp.ne.s16.totalorder %v182, 0
    %vm188 = vcmp.ne.s16.totalorder %v186, 0
    %v189 = vsel %vm187, %v171, 0
    %v190 = vsel %vm188, %v175, 0
    %193 = vrot.lane.b32.xlu0 %v164, 16
    %v194 = vpop.permute.xlu0 %193
    %195 = vrot.lane.b32.xlu0 %v165, 16
    %v196 = vpop.permute.xlu0 %195
    %vm197 = vcmask 130048
    %v198 = vsel %vm197, %v194, %v196
    %vm200 = vcmask 130048
    %v202 = vsel %vm200, 0, %v194
    %v205 = vsel %vm200, %v196, 0
    %207 = vrot.lane.b32.xlu0 %v136, 16
    %v208 = vpop.permute.xlu0 %207
    %209 = vrot.lane.b32.xlu0 %v137, 16
    %v210 = vpop.permute.xlu0 %209
    %v211 = vsel %vm197, %v208, %v210
    %v214 = vsel %vm200, 0, %v208
    %v217 = vsel %vm200, %v210, 0
    %221 = vrot.lane.b32.xlu0 %v189, 16
    %v222 = vpop.permute.xlu0 %221
    %223 = vrot.lane.b32.xlu0 %v190, 16
    %v224 = vpop.permute.xlu0 %223
    %v225 = vsel %vm197, %v222, %v224
    %v228 = vsel %vm200, 0, %v222
    %v231 = vsel %vm200, %v224, 0
    %v234 = vrot.slane %v214, 4
    %v235 = vrot.slane %v211, 4
    %v236 = vrot.slane %v164, 4
    %v237 = vrot.slane %v165, 4
    %v238 = vrot.slane %v189, 4
    %v239 = vrot.slane %v190, 4
    %242 = vrot.lane.b32.xlu0 %v202, 96
    %v243 = vpop.permute.xlu0 %242
    %244 = vrot.lane.b32.xlu0 %v198, 96
    %v245 = vpop.permute.xlu0 %244
    %246 = vrot.lane.b32.xlu0 %v205, 96
    %v247 = vpop.permute.xlu0 %246
    %vm248 = vcmask 785408
    %v249 = vsel %vm248, %v243, %v245
    %v250 = vsel %vm248, %v245, %v247
    %v252 = vrot.slane %v217, 4
    %253 = vrot.lane.b32.xlu0 %v234, 96
    %v254 = vpop.permute.xlu0 %253
    %255 = vrot.lane.b32.xlu0 %v235, 96
    %v256 = vpop.permute.xlu0 %255
    %257 = vrot.lane.b32.xlu0 %v252, 96
    %v258 = vpop.permute.xlu0 %257
    %v259 = vsel %vm248, %v254, %v256
    %v260 = vsel %vm248, %v256, %v258
    %263 = vrot.lane.b32.xlu0 %v228, 96
    %v264 = vpop.permute.xlu0 %263
    %265 = vrot.lane.b32.xlu0 %v225, 96
    %v266 = vpop.permute.xlu0 %265
    %267 = vrot.lane.b32.xlu0 %v231, 96
    %v268 = vpop.permute.xlu0 %267
    %v269 = vsel %vm248, %v264, %v266
    %v270 = vsel %vm248, %v266, %v268
    %vm271 = vcmask 1043456
    %v273 = vsel %vm271, %v202, %v234
    %v277 = vsel %vm271, %v198, %v235
    %v280 = vsel %vm271, %v228, %v236
    %v284 = vsel %vm271, %v225, %v237
    %v288 = vsel %vm271, %v136, %v238
    %v292 = vsel %vm271, %v137, %v239
    %v296 = vsel %vm271, %v249, %v259
    %v300 = vsel %vm271, %v250, %v260
    %v302 = vld [vmem:[%s2] sm:$0xf]
    %vm303 = vcmask 588800
    %v305 = vsel %vm303, %v302, 0
    %v308 = vsel %vm271, %v269, 0
    %v311 = vsel %vm271, %v270, 0
    %313 = vmatprep.subr.bf16.mxu0 0
    %314 = vmatpush1.bf16.msra.mxu0 0
    %315 = vmatprep.subr.bf16.mxu0 0
    %316 = vmatpush1.bf16.msra.mxu0 0
    %317 = vmatprep.subr.bf16.mxu0 0
    %318 = vmatpush1.bf16.msra.mxu0 0
    %319 = vmatprep.subr.bf16.mxu0 %v311
    %320 = vmatpush1.bf16.msra.mxu0 %v308
    %321 = vmatprep.subr.bf16.mxu0 %v300
    %322 = vmatpush1.bf16.msra.mxu0 %v296
    %323 = vmatprep.subr.bf16.mxu0 %v292
    %324 = vmatpush1.bf16.msra.mxu0 %v288
    %325 = vmatprep.subr.bf16.mxu0 %v284
    %326 = vmatpush1.bf16.msra.mxu0 %v280
    %327 = vmatprep.subr.bf16.mxu0 %v277
    %328 = vmatpush1.bf16.msra.mxu0 %v273
    %329 = vmatprep.subr.bf16.mxu0 0
    %330 = vmatpush2.bf16.msra.mxu0 0
    %331 = vmatprep.subr.bf16.mxu0 0
    %332 = vmatpush2.bf16.msra.mxu0 0
    %333 = vmatprep.subr.bf16.mxu0 0
    %334 = vmatpush2.bf16.msra.mxu0 0
    %335 = vmatprep.subr.bf16.mxu0 0
    %336 = vmatpush2.bf16.msra.mxu0 0
    %337 = vmatprep.subr.bf16.mxu0 0
    %338 = vmatpush2.bf16.msra.mxu0 0
    %339 = vmatprep.subr.bf16.mxu0 0
    %340 = vmatpush2.bf16.msra.mxu0 0
    %341 = vmatprep.subr.bf16.mxu0 0
    %342 = vmatpush2.bf16.msra.mxu0 0
    %343 = vmatprep.subr.bf16.mxu0 0
    %344 = vmatpush2.bf16.msra.mxu0 0
    %345 = vmatprep.mubr.bf16.mxu0 0
    %346 = vmatmul.mubr.bf16.gmra.mxu0 %v305
    %v347 = vpop.f32.mrf.mxu0
    %v348 = vadd.f32 0.0, %v347
    %v349 = vpop.f32.mrf.mxu0
    %v350 = vadd.f32 0.0, %v349
    %v351 = vpop.f32.mrf.mxu0
    %v352 = vpop.f32.mrf.mxu0
    %353 = vdwg.mxu0
    %v354 = vpack.c.bf16 %v348, %v348
    %v355 = vpack.c.bf16 %v350, %v350
    %358 = vrot.lane.b32.xlu0 %v354, 1
    %v359 = vpop.permute.xlu0 %358
    %360 = vrot.lane.b32.xlu0 %v355, 1
    %v361 = vpop.permute.xlu0 %360
    %v362 = vsel %vm144, %v359, %v361
    %v365 = vsel %vm147, 0, %v359
    %v367 = vsel %vm162, %v365, 0
    %v368 = vsel %vm163, %v362, 0
    %369 = vrot.lane.b32.xlu0 %v354, 127
    %v370 = vpop.permute.xlu0 %369
    %371 = vrot.lane.b32.xlu0 %v355, 127
    %v372 = vpop.permute.xlu0 %371
    %v373 = vsel %vm170, %v370, %v372
    %v376 = vsel %vm173, %v372, 0
    %v378 = vsel %vm187, %v373, 0
    %v379 = vsel %vm188, %v376, 0
    %382 = vrot.lane.b32.xlu0 %v367, 16
    %v383 = vpop.permute.xlu0 %382
    %384 = vrot.lane.b32.xlu0 %v368, 16
    %v385 = vpop.permute.xlu0 %384
    %v386 = vsel %vm197, %v383, %v385
    %v388 = vsel %vm200, 0, %v383
    %v390 = vsel %vm200, %v385, 0
    %391 = vrot.lane.b32.xlu0 %v354, 16
    %v392 = vpop.permute.xlu0 %391
    %393 = vrot.lane.b32.xlu0 %v355, 16
    %v394 = vpop.permute.xlu0 %393
    %v395 = vsel %vm197, %v392, %v394
    %v397 = vsel %vm200, 0, %v392
    %v399 = vsel %vm200, %v394, 0
    %402 = vrot.lane.b32.xlu0 %v378, 16
    %v403 = vpop.permute.xlu0 %402
    %404 = vrot.lane.b32.xlu0 %v379, 16
    %v405 = vpop.permute.xlu0 %404
    %v406 = vsel %vm197, %v403, %v405
    %v408 = vsel %vm200, 0, %v403
    %v410 = vsel %vm200, %v405, 0
    %v412 = vrot.slane %v397, 4
    %v413 = vrot.slane %v395, 4
    %v414 = vrot.slane %v367, 4
    %v415 = vrot.slane %v368, 4
    %v416 = vrot.slane %v378, 4
    %v417 = vrot.slane %v379, 4
    %420 = vrot.lane.b32.xlu0 %v388, 96
    %v421 = vpop.permute.xlu0 %420
    %422 = vrot.lane.b32.xlu0 %v386, 96
    %v423 = vpop.permute.xlu0 %422
    %424 = vrot.lane.b32.xlu0 %v390, 96
    %v425 = vpop.permute.xlu0 %424
    %v426 = vsel %vm248, %v421, %v423
    %v427 = vsel %vm248, %v423, %v425
    %v429 = vrot.slane %v399, 4
    %430 = vrot.lane.b32.xlu0 %v412, 96
    %v431 = vpop.permute.xlu0 %430
    %432 = vrot.lane.b32.xlu0 %v413, 96
    %v433 = vpop.permute.xlu0 %432
    %434 = vrot.lane.b32.xlu0 %v429, 96
    %v435 = vpop.permute.xlu0 %434
    %v436 = vsel %vm248, %v431, %v433
    %v437 = vsel %vm248, %v433, %v435
    %440 = vrot.lane.b32.xlu0 %v408, 96
    %v441 = vpop.permute.xlu0 %440
    %442 = vrot.lane.b32.xlu0 %v406, 96
    %v443 = vpop.permute.xlu0 %442
    %444 = vrot.lane.b32.xlu0 %v410, 96
    %v445 = vpop.permute.xlu0 %444
    %v446 = vsel %vm248, %v441, %v443
    %v447 = vsel %vm248, %v443, %v445
    %v449 = vsel %vm271, %v388, %v412
    %v453 = vsel %vm271, %v386, %v413
    %v456 = vsel %vm271, %v408, %v414
    %v460 = vsel %vm271, %v406, %v415
    %v464 = vsel %vm271, %v354, %v416
    %v468 = vsel %vm271, %v355, %v417
    %v472 = vsel %vm271, %v426, %v436
    %v476 = vsel %vm271, %v427, %v437
    %v478 = vld [vmem:[%s3] sm:$0xf]
    %v480 = vsel %vm303, %v478, 0
    %v483 = vsel %vm271, %v446, 0
    %v486 = vsel %vm271, %v447, 0
    %488 = vmatprep.subr.bf16.mxu0 0
    %489 = vmatpush1.bf16.msra.mxu0 0
    %490 = vmatprep.subr.bf16.mxu0 0
    %491 = vmatpush1.bf16.msra.mxu0 0
    %492 = vmatprep.subr.bf16.mxu0 0
    %493 = vmatpush1.bf16.msra.mxu0 0
    %494 = vmatprep.subr.bf16.mxu0 %v486
    %495 = vmatpush1.bf16.msra.mxu0 %v483
    %496 = vmatprep.subr.bf16.mxu0 %v476
    %497 = vmatpush1.bf16.msra.mxu0 %v472
    %498 = vmatprep.subr.bf16.mxu0 %v468
    %499 = vmatpush1.bf16.msra.mxu0 %v464
    %500 = vmatprep.subr.bf16.mxu0 %v460
    %501 = vmatpush1.bf16.msra.mxu0 %v456
    %502 = vmatprep.subr.bf16.mxu0 %v453
    %503 = vmatpush1.bf16.msra.mxu0 %v449
    %504 = vmatprep.subr.bf16.mxu0 0
    %505 = vmatpush2.bf16.msra.mxu0 0
    %506 = vmatprep.subr.bf16.mxu0 0
    %507 = vmatpush2.bf16.msra.mxu0 0
    %508 = vmatprep.subr.bf16.mxu0 0
    %509 = vmatpush2.bf16.msra.mxu0 0
    %510 = vmatprep.subr.bf16.mxu0 0
    %511 = vmatpush2.bf16.msra.mxu0 0
    %512 = vmatprep.subr.bf16.mxu0 0
    %513 = vmatpush2.bf16.msra.mxu0 0
    %514 = vmatprep.subr.bf16.mxu0 0
    %515 = vmatpush2.bf16.msra.mxu0 0
    %516 = vmatprep.subr.bf16.mxu0 0
    %517 = vmatpush2.bf16.msra.mxu0 0
    %518 = vmatprep.subr.bf16.mxu0 0
    %519 = vmatpush2.bf16.msra.mxu0 0
    %520 = vmatprep.mubr.bf16.mxu0 0
    %521 = vmatmul.mubr.bf16.gmra.mxu0 %v480
    %v522 = vpop.f32.mrf.mxu0
    %v523 = vadd.f32 0.0, %v522
    %v524 = vpop.f32.mrf.mxu0
    %v525 = vadd.f32 0.0, %v524
    %v526 = vpop.f32.mrf.mxu0
    %v527 = vpop.f32.mrf.mxu0
    %528 = vdwg.mxu0
    %v529 = vadd.bf16 %v202, %v214
    %v530 = vadd.bf16 %v198, %v211
    %v531 = vadd.bf16 %v529, %v228
    %v532 = vadd.bf16 %v530, %v225
    %v533 = vunpack.c.l.bf16 %v531
    %v534 = vunpack.c.l.bf16 %v532
    %v535 = vadd.bf16 %v164, %v136
    %v536 = vadd.bf16 %v165, %v137
    %v537 = vadd.bf16 %v535, %v189
    %v538 = vadd.bf16 %v536, %v190
    %v539 = vunpack.c.l.bf16 %v537
    %v540 = vunpack.c.l.bf16 %v538
    %v541 = vadd.f32 %v533, %v539
    %v542 = vadd.f32 %v534, %v540
    %v543 = vadd.bf16 %v205, %v217
    %v544 = vadd.bf16 %v543, %v231
    %v545 = vunpack.c.l.bf16 %v544
    %549 = vrot.lane.b32.xlu0 %v533, 96
    %v550 = vpop.permute.xlu0 %549
    %551 = vrot.lane.b32.xlu0 %v534, 96
    %v552 = vpop.permute.xlu0 %551
    %553 = vrot.lane.b32.xlu0 %v545, 96
    %v554 = vpop.permute.xlu0 %553
    %vm555 = vcmask 785408
    %v556 = vsel %vm555, %v550, %v552
    %v557 = vsel %vm555, %v552, %v554
    %v560 = vadd.f32 %v541, %v556
    %v561 = vadd.f32 %v542, %v557
    %v562 = vmul.f32 %v560, 0.11111111
    %v563 = vmul.f32 %v561, 0.11111111
    %v564 = vpack.c.bf16 %v562, %v562
    %v565 = vpack.c.bf16 %v563, %v563
    %568 = vrot.lane.b32.xlu0 %v564, 1
    %v569 = vpop.permute.xlu0 %568
    %570 = vrot.lane.b32.xlu0 %v565, 1
    %v571 = vpop.permute.xlu0 %570
    %v572 = vsel %vm144, %v569, %v571
    %v575 = vsel %vm147, 0, %v569
    %v577 = vsel %vm162, %v575, 0
    %v578 = vsel %vm163, %v572, 0
    %579 = vrot.lane.b32.xlu0 %v564, 127
    %v580 = vpop.permute.xlu0 %579
    %581 = vrot.lane.b32.xlu0 %v565, 127
    %v582 = vpop.permute.xlu0 %581
    %v583 = vsel %vm170, %v580, %v582
    %v586 = vsel %vm173, %v582, 0
    %v588 = vsel %vm187, %v583, 0
    %v589 = vsel %vm188, %v586, 0
    %592 = vrot.lane.b32.xlu0 %v577, 16
    %v593 = vpop.permute.xlu0 %592
    %594 = vrot.lane.b32.xlu0 %v578, 16
    %v595 = vpop.permute.xlu0 %594
    %v596 = vsel %vm197, %v593, %v595
    %v598 = vsel %vm200, 0, %v593
    %v600 = vsel %vm200, %v595, 0
    %601 = vrot.lane.b32.xlu0 %v564, 16
    %v602 = vpop.permute.xlu0 %601
    %603 = vrot.lane.b32.xlu0 %v565, 16
    %v604 = vpop.permute.xlu0 %603
    %v605 = vsel %vm197, %v602, %v604
    %v607 = vsel %vm200, 0, %v602
    %v609 = vsel %vm200, %v604, 0
    %612 = vrot.lane.b32.xlu0 %v588, 16
    %v613 = vpop.permute.xlu0 %612
    %614 = vrot.lane.b32.xlu0 %v589, 16
    %v615 = vpop.permute.xlu0 %614
    %v616 = vsel %vm197, %v613, %v615
    %v618 = vsel %vm200, 0, %v613
    %v620 = vsel %vm200, %v615, 0
    %v622 = vrot.slane %v607, 4
    %v623 = vrot.slane %v605, 4
    %v624 = vrot.slane %v577, 4
    %v625 = vrot.slane %v578, 4
    %v626 = vrot.slane %v588, 4
    %v627 = vrot.slane %v589, 4
    %630 = vrot.lane.b32.xlu0 %v598, 96
    %v631 = vpop.permute.xlu0 %630
    %632 = vrot.lane.b32.xlu0 %v596, 96
    %v633 = vpop.permute.xlu0 %632
    %634 = vrot.lane.b32.xlu0 %v600, 96
    %v635 = vpop.permute.xlu0 %634
    %v636 = vsel %vm248, %v631, %v633
    %v637 = vsel %vm248, %v633, %v635
    %v639 = vrot.slane %v609, 4
    %640 = vrot.lane.b32.xlu0 %v622, 96
    %v641 = vpop.permute.xlu0 %640
    %642 = vrot.lane.b32.xlu0 %v623, 96
    %v643 = vpop.permute.xlu0 %642
    %644 = vrot.lane.b32.xlu0 %v639, 96
    %v645 = vpop.permute.xlu0 %644
    %v646 = vsel %vm248, %v641, %v643
    %v647 = vsel %vm248, %v643, %v645
    %650 = vrot.lane.b32.xlu0 %v618, 96
    %v651 = vpop.permute.xlu0 %650
    %652 = vrot.lane.b32.xlu0 %v616, 96
    %v653 = vpop.permute.xlu0 %652
    %654 = vrot.lane.b32.xlu0 %v620, 96
    %v655 = vpop.permute.xlu0 %654
    %v656 = vsel %vm248, %v651, %v653
    %v657 = vsel %vm248, %v653, %v655
    %v659 = vsel %vm271, %v598, %v622
    %v663 = vsel %vm271, %v596, %v623
    %v666 = vsel %vm271, %v618, %v624
    %v670 = vsel %vm271, %v616, %v625
    %v674 = vsel %vm271, %v564, %v626
    %v678 = vsel %vm271, %v565, %v627
    %v682 = vsel %vm271, %v636, %v646
    %v686 = vsel %vm271, %v637, %v647
    %v688 = vld [vmem:[%s4] sm:$0xf]
    %v690 = vsel %vm303, %v688, 0
    %v693 = vsel %vm271, %v656, 0
    %v696 = vsel %vm271, %v657, 0
    %698 = vmatprep.subr.bf16.mxu0 0
    %699 = vmatpush1.bf16.msra.mxu0 0
    %700 = vmatprep.subr.bf16.mxu0 0
    %701 = vmatpush1.bf16.msra.mxu0 0
    %702 = vmatprep.subr.bf16.mxu0 0
    %703 = vmatpush1.bf16.msra.mxu0 0
    %704 = vmatprep.subr.bf16.mxu0 %v696
    %705 = vmatpush1.bf16.msra.mxu0 %v693
    %706 = vmatprep.subr.bf16.mxu0 %v686
    %707 = vmatpush1.bf16.msra.mxu0 %v682
    %708 = vmatprep.subr.bf16.mxu0 %v678
    %709 = vmatpush1.bf16.msra.mxu0 %v674
    %710 = vmatprep.subr.bf16.mxu0 %v670
    %711 = vmatpush1.bf16.msra.mxu0 %v666
    %712 = vmatprep.subr.bf16.mxu0 %v663
    %713 = vmatpush1.bf16.msra.mxu0 %v659
    %714 = vmatprep.subr.bf16.mxu0 0
    %715 = vmatpush2.bf16.msra.mxu0 0
    %716 = vmatprep.subr.bf16.mxu0 0
    %717 = vmatpush2.bf16.msra.mxu0 0
    %718 = vmatprep.subr.bf16.mxu0 0
    %719 = vmatpush2.bf16.msra.mxu0 0
    %720 = vmatprep.subr.bf16.mxu0 0
    %721 = vmatpush2.bf16.msra.mxu0 0
    %722 = vmatprep.subr.bf16.mxu0 0
    %723 = vmatpush2.bf16.msra.mxu0 0
    %724 = vmatprep.subr.bf16.mxu0 0
    %725 = vmatpush2.bf16.msra.mxu0 0
    %726 = vmatprep.subr.bf16.mxu0 0
    %727 = vmatpush2.bf16.msra.mxu0 0
    %728 = vmatprep.subr.bf16.mxu0 0
    %729 = vmatpush2.bf16.msra.mxu0 0
    %730 = vmatprep.mubr.bf16.mxu0 0
    %731 = vmatmul.mubr.bf16.gmra.mxu0 %v690
    %v732 = vpop.f32.mrf.mxu0
    %v733 = vadd.f32 0.0, %v732
    %v734 = vpop.f32.mrf.mxu0
    %v735 = vadd.f32 0.0, %v734
    %v736 = vpop.f32.mrf.mxu0
    %v737 = vpop.f32.mrf.mxu0
    %738 = vdwg.mxu0
    %v739 = vld [vmem:[%s5] sm:$0xf]
    %v740 = vld [vmem:[%s5 + $0x4] sm:$0xf]
    %v741 = vld [vmem:[%s5 + $0x8] sm:$0xf]
    %v742 = vld [vmem:[%s5 + $0xc] sm:$0xf]
    %v743 = vpack.c.bf16 %v523, %v523
    %v744 = vpack.c.bf16 %v525, %v525
    %v749 = vunpack.c.l.b16 %v739
    %v750 = vunpack.c.l.b16 %v740
    %v751 = vunpack.c.l.b16 %v741
    %v752 = vunpack.c.l.b16 %v742
    %v753 = vpack.c.b16 %v750, %v749
    %v754 = vpack.c.b16 %v752, %v751
    %755 = vrot.lane.b32.xlu0 %v753, 120
    %v756 = vpop.permute.xlu0 %755
    %757 = vrot.lane.b32.xlu0 %v754, 120
    %v758 = vpop.permute.xlu0 %757
    %vm759 = vcmask 64512
    %v761 = vsel %vm759, %v756, 0
    %v764 = vsel %vm759, %v758, 0
    %v767 = vsel %vm271, %v743, 0
    %v770 = vsel %vm271, %v744, 0
    %772 = vmatprep.subr.bf16.mxu0 0
    %773 = vmatpush1.bf16.msra.mxu0 0
    %774 = vmatprep.subr.bf16.mxu0 0
    %775 = vmatpush1.bf16.msra.mxu0 0
    %776 = vmatprep.subr.bf16.mxu0 0
    %777 = vmatpush1.bf16.msra.mxu0 0
    %778 = vmatprep.subr.bf16.mxu0 0
    %779 = vmatpush1.bf16.msra.mxu0 0
    %780 = vmatprep.subr.bf16.mxu0 0
    %781 = vmatpush1.bf16.msra.mxu0 0
    %782 = vmatprep.subr.bf16.mxu0 0
    %783 = vmatpush1.bf16.msra.mxu0 0
    %784 = vmatprep.subr.bf16.mxu0 0
    %785 = vmatpush1.bf16.msra.mxu0 0
    %786 = vmatprep.subr.bf16.mxu0 %v770
    %787 = vmatpush1.bf16.msra.mxu0 %v767
    %788 = vmatprep.subr.bf16.mxu0 0
    %789 = vmatpush2.bf16.msra.mxu0 0
    %790 = vmatprep.subr.bf16.mxu0 0
    %791 = vmatpush2.bf16.msra.mxu0 0
    %792 = vmatprep.subr.bf16.mxu0 0
    %793 = vmatpush2.bf16.msra.mxu0 0
    %794 = vmatprep.subr.bf16.mxu0 0
    %795 = vmatpush2.bf16.msra.mxu0 0
    %796 = vmatprep.subr.bf16.mxu0 0
    %797 = vmatpush2.bf16.msra.mxu0 0
    %798 = vmatprep.subr.bf16.mxu0 0
    %799 = vmatpush2.bf16.msra.mxu0 0
    %800 = vmatprep.subr.bf16.mxu0 0
    %801 = vmatpush2.bf16.msra.mxu0 0
    %802 = vmatprep.subr.bf16.mxu0 0
    %803 = vmatpush2.bf16.msra.mxu0 0
    %804 = vmatprep.mubr.bf16.mxu0 0
    %805 = vmatmul.mubr.bf16.gmra.mxu0 %v761
    %v806 = vpop.f32.mrf.mxu0
    %v807 = vadd.f32 0.0, %v806
    %v808 = vpop.f32.mrf.mxu0
    %v809 = vadd.f32 0.0, %v808
    %v810 = vpop.f32.mrf.mxu0
    %v811 = vadd.f32 0.0, %v810
    %v812 = vpop.f32.mrf.mxu0
    %v813 = vadd.f32 0.0, %v812
    %814 = vmatprep.mubr.bf16.mxu0 0
    %815 = vmatmul.mubr.bf16.gmra.mxu0 %v764
    %v816 = vpop.f32.mrf.mxu0
    %v817 = vadd.f32 0.0, %v816
    %v818 = vpop.f32.mrf.mxu0
    %v819 = vadd.f32 0.0, %v818
    %v820 = vpop.f32.mrf.mxu0
    %v821 = vadd.f32 0.0, %v820
    %v822 = vpop.f32.mrf.mxu0
    %v823 = vadd.f32 0.0, %v822
    %824 = vdwg.mxu0
    %v826 = vsel %vm759, %v753, 0
    %v829 = vsel %vm759, %v754, 0
    %v831 = vsel %vm271, %v564, 0
    %v833 = vsel %vm271, %v565, 0
    %835 = vmatprep.subr.bf16.mxu0 0
    %836 = vmatpush1.bf16.msra.mxu0 0
    %837 = vmatprep.subr.bf16.mxu0 0
    %838 = vmatpush1.bf16.msra.mxu0 0
    %839 = vmatprep.subr.bf16.mxu0 0
    %840 = vmatpush1.bf16.msra.mxu0 0
    %841 = vmatprep.subr.bf16.mxu0 0
    %842 = vmatpush1.bf16.msra.mxu0 0
    %843 = vmatprep.subr.bf16.mxu0 0
    %844 = vmatpush1.bf16.msra.mxu0 0
    %845 = vmatprep.subr.bf16.mxu0 0
    %846 = vmatpush1.bf16.msra.mxu0 0
    %847 = vmatprep.subr.bf16.mxu0 0
    %848 = vmatpush1.bf16.msra.mxu0 0
    %849 = vmatprep.subr.bf16.mxu0 %v833
    %850 = vmatpush1.bf16.msra.mxu0 %v831
    %851 = vmatprep.subr.bf16.mxu0 0
    %852 = vmatpush2.bf16.msra.mxu0 0
    %853 = vmatprep.subr.bf16.mxu0 0
    %854 = vmatpush2.bf16.msra.mxu0 0
    %855 = vmatprep.subr.bf16.mxu0 0
    %856 = vmatpush2.bf16.msra.mxu0 0
    %857 = vmatprep.subr.bf16.mxu0 0
    %858 = vmatpush2.bf16.msra.mxu0 0
    %859 = vmatprep.subr.bf16.mxu0 0
    %860 = vmatpush2.bf16.msra.mxu0 0
    %861 = vmatprep.subr.bf16.mxu0 0
    %862 = vmatpush2.bf16.msra.mxu0 0
    %863 = vmatprep.subr.bf16.mxu0 0
    %864 = vmatpush2.bf16.msra.mxu0 0
    %865 = vmatprep.subr.bf16.mxu0 0
    %866 = vmatpush2.bf16.msra.mxu0 0
    %867 = vmatprep.mubr.bf16.mxu0 0
    %868 = vmatmul.mubr.bf16.gmra.mxu0 %v826
    %v869 = vpop.f32.mrf.mxu0
    %v870 = vadd.f32 %v807, %v869
    %v871 = vpop.f32.mrf.mxu0
    %v872 = vadd.f32 %v809, %v871
    %v873 = vpop.f32.mrf.mxu0
    %v874 = vadd.f32 %v811, %v873
    %v875 = vpop.f32.mrf.mxu0
    %v876 = vadd.f32 %v813, %v875
    %877 = vmatprep.mubr.bf16.mxu0 0
    %878 = vmatmul.mubr.bf16.gmra.mxu0 %v829
    %v879 = vpop.f32.mrf.mxu0
    %v880 = vadd.f32 %v817, %v879
    %v881 = vpop.f32.mrf.mxu0
    %v882 = vadd.f32 %v819, %v881
    %v883 = vpop.f32.mrf.mxu0
    %v884 = vadd.f32 %v821, %v883
    %v885 = vpop.f32.mrf.mxu0
    %v886 = vadd.f32 %v823, %v885
    %887 = vdwg.mxu0
    %v888 = vpack.c.bf16 %v733, %v733
    %v889 = vpack.c.bf16 %v735, %v735
    %890 = vrot.lane.b32.xlu0 %v753, 112
    %v891 = vpop.permute.xlu0 %890
    %892 = vrot.lane.b32.xlu0 %v754, 112
    %v893 = vpop.permute.xlu0 %892
    %v895 = vsel %vm759, %v891, 0
    %v898 = vsel %vm759, %v893, 0
    %v901 = vsel %vm271, %v888, 0
    %v904 = vsel %vm271, %v889, 0
    %906 = vmatprep.subr.bf16.mxu0 0
    %907 = vmatpush1.bf16.msra.mxu0 0
    %908 = vmatprep.subr.bf16.mxu0 0
    %909 = vmatpush1.bf16.msra.mxu0 0
    %910 = vmatprep.subr.bf16.mxu0 0
    %911 = vmatpush1.bf16.msra.mxu0 0
    %912 = vmatprep.subr.bf16.mxu0 0
    %913 = vmatpush1.bf16.msra.mxu0 0
    %914 = vmatprep.subr.bf16.mxu0 0
    %915 = vmatpush1.bf16.msra.mxu0 0
    %916 = vmatprep.subr.bf16.mxu0 0
    %917 = vmatpush1.bf16.msra.mxu0 0
    %918 = vmatprep.subr.bf16.mxu0 0
    %919 = vmatpush1.bf16.msra.mxu0 0
    %920 = vmatprep.subr.bf16.mxu0 %v904
    %921 = vmatpush1.bf16.msra.mxu0 %v901
    %922 = vmatprep.subr.bf16.mxu0 0
    %923 = vmatpush2.bf16.msra.mxu0 0
    %924 = vmatprep.subr.bf16.mxu0 0
    %925 = vmatpush2.bf16.msra.mxu0 0
    %926 = vmatprep.subr.bf16.mxu0 0
    %927 = vmatpush2.bf16.msra.mxu0 0
    %928 = vmatprep.subr.bf16.mxu0 0
    %929 = vmatpush2.bf16.msra.mxu0 0
    %930 = vmatprep.subr.bf16.mxu0 0
    %931 = vmatpush2.bf16.msra.mxu0 0
    %932 = vmatprep.subr.bf16.mxu0 0
    %933 = vmatpush2.bf16.msra.mxu0 0
    %934 = vmatprep.subr.bf16.mxu0 0
    %935 = vmatpush2.bf16.msra.mxu0 0
    %936 = vmatprep.subr.bf16.mxu0 0
    %937 = vmatpush2.bf16.msra.mxu0 0
    %938 = vmatprep.mubr.bf16.mxu0 0
    %939 = vmatmul.mubr.bf16.gmra.mxu0 %v895
    %v940 = vpop.f32.mrf.mxu0
    %v941 = vadd.f32 0.0, %v940
    %v942 = vpop.f32.mrf.mxu0
    %v943 = vadd.f32 0.0, %v942
    %v944 = vpop.f32.mrf.mxu0
    %v945 = vadd.f32 0.0, %v944
    %v946 = vpop.f32.mrf.mxu0
    %v947 = vadd.f32 0.0, %v946
    %948 = vmatprep.mubr.bf16.mxu0 0
    %949 = vmatmul.mubr.bf16.gmra.mxu0 %v898
    %v950 = vpop.f32.mrf.mxu0
    %v951 = vadd.f32 0.0, %v950
    %v952 = vpop.f32.mrf.mxu0
    %v953 = vadd.f32 0.0, %v952
    %v954 = vpop.f32.mrf.mxu0
    %v955 = vadd.f32 0.0, %v954
    %v956 = vpop.f32.mrf.mxu0
    %v957 = vadd.f32 0.0, %v956
    %958 = vdwg.mxu0
    %v959 = vadd.f32 %v870, %v941
    %v960 = vadd.f32 %v872, %v943
    %v961 = vadd.f32 %v874, %v945
    %v962 = vadd.f32 %v876, %v947
    %v963 = vadd.f32 %v880, %v951
    %v964 = vadd.f32 %v882, %v953
    %v965 = vadd.f32 %v884, %v955
    %v966 = vadd.f32 %v886, %v957
    %v967 = vadd.f32 %v959, %v78
    %v968 = vadd.f32 %v960, %v79
    %v969 = vadd.f32 %v961, %v80
    %v970 = vadd.f32 %v962, %v81
    %v971 = vadd.f32 %v963, %v82
    %v972 = vadd.f32 %v964, %v83
    %v973 = vadd.f32 %v965, %v84
    %v974 = vadd.f32 %v966, %v85
    %v975 = vadd.f32 %v967, %v968
    %976 = vadd.xlane.f32.xlu0 %v975
    %v977 = vpop.xlane.xlu0 %976
    %v978 = vadd.f32 %v969, %v970
    %979 = vadd.xlane.f32.xlu0 %v978
    %v980 = vpop.xlane.xlu0 %979
    %v981 = vadd.f32 %v971, %v972
    %982 = vadd.xlane.f32.xlu0 %v981
    %v983 = vpop.xlane.xlu0 %982
    %v984 = vadd.f32 %v973, %v974
    %985 = vadd.xlane.f32.xlu0 %v984
    %v986 = vpop.xlane.xlu0 %985
    %v987 = vmul.f32 %v977, 0.00390625
    %v988 = vmul.f32 %v980, 0.00390625
    %v989 = vmul.f32 %v983, 0.00390625
    %v990 = vmul.f32 %v986, 0.00390625
    %v991 = vld [vmem:[%s6] sm:$0xff]
    %v992 = vld [vmem:[%s6 + $0x8] sm:$0xff]
    %v993 = vld [vmem:[%s6 + $0x10] sm:$0xff]
    %v994 = vld [vmem:[%s6 + $0x18] sm:$0xff]
    %v995 = vmul.f32 %v991, %v987
    %v996 = vmul.f32 %v992, %v988
    %v997 = vmul.f32 %v993, %v989
    %v998 = vmul.f32 %v994, %v990
    %v999 = vsel %vm759, %v995, 0.0
    %v1000 = vsel %vm759, %v996, 0.0
    %v1001 = vadd.f32 %v999, %v1000
    %v1002 = vsel %vm759, %v997, 0.0
    %v1003 = vadd.f32 %v1001, %v1002
    %v1004 = vsel %vm759, %v998, 0.0
    %v1005 = vadd.f32 %v1003, %v1004
    %v1006 = vrot.slane %v1005, 4
    %v1007 = vadd.f32 %v1005, %v1006
    %v1008 = vrot.slane %v1007, 2
    %v1009 = vadd.f32 %v1007, %v1008
    %v1010 = vrot.slane %v1009, 1
    %v1011 = vadd.f32 %v1009, %v1010
    %v1012 = vmax.f32 %v1011, 0.0
    %v1013 = vld [vmem:[%s7] sm:$0xff]
    %v1014 = vld [vmem:[%s7 + $0x8] sm:$0xff]
    %v1015 = vld [vmem:[%s7 + $0x10] sm:$0xff]
    %v1016 = vld [vmem:[%s7 + $0x18] sm:$0xff]
    %v1017 = vmul.f32 %v1013, %v1012
    %v1018 = vmul.f32 %v1014, %v1012
    %v1019 = vmul.f32 %v1015, %v1012
    %v1020 = vmul.f32 %v1016, %v1012
    %v1021 = vsel %vm759, %v1017, 0.0
    %1022 = vadd.xlane.f32.xlu0 %v1021
    %v1023 = vpop.xlane.xlu0 %1022
    %v1024 = vsel %vm759, %v1018, 0.0
    %1025 = vadd.xlane.f32.xlu0 %v1024
    %v1026 = vpop.xlane.xlu0 %1025
    %v1027 = vsel %vm759, %v1019, 0.0
    %1028 = vadd.xlane.f32.xlu0 %v1027
    %v1029 = vpop.xlane.xlu0 %1028
    %v1030 = vsel %vm759, %v1020, 0.0
    %1031 = vadd.xlane.f32.xlu0 %v1030
    %v1032 = vpop.xlane.xlu0 %1031
    %v1033 = vxor.u32 %v1023, 2147483648
    %v1034 = vxor.u32 %v1026, 2147483648
    %v1035 = vxor.u32 %v1029, 2147483648
    %v1036 = vxor.u32 %v1032, 2147483648
    %v1037 = vmul.f32 %v1033, 1.442695
    %v1038 = vpow.pop %v1037
    %v1039 = vmul.f32 %v1034, 1.442695
    %v1040 = vpow.pop %v1039
    %v1041 = vmul.f32 %v1035, 1.442695
    %v1042 = vpow.pop %v1041
    %v1043 = vmul.f32 %v1036, 1.442695
    %v1044 = vpow.pop %v1043
    %v1045 = vadd.f32 %v1038, 1.0
    %v1046 = vadd.f32 %v1040, 1.0
    %v1047 = vadd.f32 %v1042, 1.0
    %v1048 = vadd.f32 %v1044, 1.0
    %v1049 = vrcp.pop %v1045
    %v1050 = vmul.f32 1.0, %v1049
    %v1051 = vrcp.pop %v1046
    %v1052 = vmul.f32 1.0, %v1051
    %v1053 = vrcp.pop %v1047
    %v1054 = vmul.f32 1.0, %v1053
    %v1055 = vrcp.pop %v1048
    %v1056 = vmul.f32 1.0, %v1055
    %v1057 = vmul.f32 %v967, %v1050
    %v1058 = vmul.f32 %v968, %v1050
    %v1059 = vmul.f32 %v969, %v1052
    %v1060 = vmul.f32 %v970, %v1052
    %v1061 = vmul.f32 %v971, %v1054
    %v1062 = vmul.f32 %v972, %v1054
    %v1063 = vmul.f32 %v973, %v1056
    %v1064 = vmul.f32 %v974, %v1056
    %1065 = vst [vmem:[#allocation5] sm:$0xff] %v1057
    %1066 = vst [vmem:[#allocation5 + $0x8] sm:$0xff] %v1058
    %1067 = vst [vmem:[#allocation5 + $0x10] sm:$0xff] %v1059
    %1068 = vst [vmem:[#allocation5 + $0x18] sm:$0xff] %v1060
    %1069 = vst [vmem:[#allocation5 + $0x20] sm:$0xff] %v1061
    %1070 = vst [vmem:[#allocation5 + $0x28] sm:$0xff] %v1062
    %1071 = vst [vmem:[#allocation5 + $0x30] sm:$0xff] %v1063
    %1072 = vst [vmem:[#allocation5 + $0x38] sm:$0xff] %v1064
    %s1073 = scalar_lea.vmem [#allocation2], 64
    %v1074 = vld [vmem:[%s1073] sm:$0xff]
    %v1075 = vld [vmem:[%s1073 + $0x8] sm:$0xff]
    %v1076 = vld [vmem:[%s1073 + $0x10] sm:$0xff]
    %v1077 = vld [vmem:[%s1073 + $0x18] sm:$0xff]
    %v1078 = vld [vmem:[%s1073 + $0x20] sm:$0xff]
    %v1079 = vld [vmem:[%s1073 + $0x28] sm:$0xff]
    %v1080 = vld [vmem:[%s1073 + $0x30] sm:$0xff]
    %v1081 = vld [vmem:[%s1073 + $0x38] sm:$0xff]
    %v1082 = vld [vmem:[%s1] sm:$0xf]
    %v1083 = vpack.c.bf16 %v1076, %v1074
    %v1084 = vpack.c.bf16 %v1077, %v1075
    %v1085 = vpack.c.bf16 %v1080, %v1078
    %v1086 = vpack.c.bf16 %v1081, %v1079
    %v1088 = vsel %vm91, %v1082, 0
    %1090 = vmatprep.subr.bf16.mxu0 0
    %1091 = vmatpush1.bf16.msra.mxu0 0
    %1092 = vmatprep.subr.bf16.mxu0 0
    %1093 = vmatpush1.bf16.msra.mxu0 0
    %1094 = vmatprep.subr.bf16.mxu0 0
    %1095 = vmatpush1.bf16.msra.mxu0 0
    %1096 = vmatprep.subr.bf16.mxu0 0
    %1097 = vmatpush1.bf16.msra.mxu0 0
    %1098 = vmatprep.subr.bf16.mxu0 0
    %1099 = vmatpush1.bf16.msra.mxu0 0
    %1100 = vmatprep.subr.bf16.mxu0 0
    %1101 = vmatpush1.bf16.msra.mxu0 0
    %1102 = vmatprep.subr.bf16.mxu0 %v1086
    %1103 = vmatpush1.bf16.msra.mxu0 %v1085
    %1104 = vmatprep.subr.bf16.mxu0 %v1084
    %1105 = vmatpush1.bf16.msra.mxu0 %v1083
    %1106 = vmatprep.subr.bf16.mxu0 0
    %1107 = vmatpush2.bf16.msra.mxu0 0
    %1108 = vmatprep.subr.bf16.mxu0 0
    %1109 = vmatpush2.bf16.msra.mxu0 0
    %1110 = vmatprep.subr.bf16.mxu0 0
    %1111 = vmatpush2.bf16.msra.mxu0 0
    %1112 = vmatprep.subr.bf16.mxu0 0
    %1113 = vmatpush2.bf16.msra.mxu0 0
    %1114 = vmatprep.subr.bf16.mxu0 0
    %1115 = vmatpush2.bf16.msra.mxu0 0
    %1116 = vmatprep.subr.bf16.mxu0 0
    %1117 = vmatpush2.bf16.msra.mxu0 0
    %1118 = vmatprep.subr.bf16.mxu0 0
    %1119 = vmatpush2.bf16.msra.mxu0 0
    %1120 = vmatprep.subr.bf16.mxu0 0
    %1121 = vmatpush2.bf16.msra.mxu0 0
    %1122 = vmatprep.mubr.bf16.mxu0 0
    %1123 = vmatmul.mubr.bf16.gmra.mxu0 %v1088
    %v1124 = vpop.f32.mrf.mxu0
    %v1125 = vadd.f32 0.0, %v1124
    %v1126 = vpop.f32.mrf.mxu0
    %v1127 = vadd.f32 0.0, %v1126
    %v1128 = vpop.f32.mrf.mxu0
    %v1129 = vpop.f32.mrf.mxu0
    %1130 = vdwg.mxu0
    %v1131 = vpack.c.bf16 %v1125, %v1125
    %v1132 = vpack.c.bf16 %v1127, %v1127
    %1135 = vrot.lane.b32.xlu0 %v1131, 1
    %v1136 = vpop.permute.xlu0 %1135
    %1137 = vrot.lane.b32.xlu0 %v1132, 1
    %v1138 = vpop.permute.xlu0 %1137
    %v1139 = vsel %vm144, %v1136, %v1138
    %v1142 = vsel %vm147, 0, %v1136
    %v1144 = vsel %vm162, %v1142, 0
    %v1145 = vsel %vm163, %v1139, 0
    %1146 = vrot.lane.b32.xlu0 %v1131, 127
    %v1147 = vpop.permute.xlu0 %1146
    %1148 = vrot.lane.b32.xlu0 %v1132, 127
    %v1149 = vpop.permute.xlu0 %1148
    %v1150 = vsel %vm170, %v1147, %v1149
    %v1153 = vsel %vm173, %v1149, 0
    %v1155 = vsel %vm187, %v1150, 0
    %v1156 = vsel %vm188, %v1153, 0
    %1159 = vrot.lane.b32.xlu0 %v1144, 16
    %v1160 = vpop.permute.xlu0 %1159
    %1161 = vrot.lane.b32.xlu0 %v1145, 16
    %v1162 = vpop.permute.xlu0 %1161
    %v1163 = vsel %vm197, %v1160, %v1162
    %v1166 = vsel %vm200, 0, %v1160
    %v1169 = vsel %vm200, %v1162, 0
    %1171 = vrot.lane.b32.xlu0 %v1131, 16
    %v1172 = vpop.permute.xlu0 %1171
    %1173 = vrot.lane.b32.xlu0 %v1132, 16
    %v1174 = vpop.permute.xlu0 %1173
    %v1175 = vsel %vm197, %v1172, %v1174
    %v1178 = vsel %vm200, 0, %v1172
    %v1181 = vsel %vm200, %v1174, 0
    %1185 = vrot.lane.b32.xlu0 %v1155, 16
    %v1186 = vpop.permute.xlu0 %1185
    %1187 = vrot.lane.b32.xlu0 %v1156, 16
    %v1188 = vpop.permute.xlu0 %1187
    %v1189 = vsel %vm197, %v1186, %v1188
    %v1192 = vsel %vm200, 0, %v1186
    %v1195 = vsel %vm200, %v1188, 0
    %v1198 = vrot.slane %v1178, 4
    %v1199 = vrot.slane %v1175, 4
    %v1200 = vrot.slane %v1144, 4
    %v1201 = vrot.slane %v1145, 4
    %v1202 = vrot.slane %v1155, 4
    %v1203 = vrot.slane %v1156, 4
    %1206 = vrot.lane.b32.xlu0 %v1166, 96
    %v1207 = vpop.permute.xlu0 %1206
    %1208 = vrot.lane.b32.xlu0 %v1163, 96
    %v1209 = vpop.permute.xlu0 %1208
    %1210 = vrot.lane.b32.xlu0 %v1169, 96
    %v1211 = vpop.permute.xlu0 %1210
    %v1212 = vsel %vm248, %v1207, %v1209
    %v1213 = vsel %vm248, %v1209, %v1211
    %v1215 = vrot.slane %v1181, 4
    %1216 = vrot.lane.b32.xlu0 %v1198, 96
    %v1217 = vpop.permute.xlu0 %1216
    %1218 = vrot.lane.b32.xlu0 %v1199, 96
    %v1219 = vpop.permute.xlu0 %1218
    %1220 = vrot.lane.b32.xlu0 %v1215, 96
    %v1221 = vpop.permute.xlu0 %1220
    %v1222 = vsel %vm248, %v1217, %v1219
    %v1223 = vsel %vm248, %v1219, %v1221
    %1226 = vrot.lane.b32.xlu0 %v1192, 96
    %v1227 = vpop.permute.xlu0 %1226
    %1228 = vrot.lane.b32.xlu0 %v1189, 96
    %v1229 = vpop.permute.xlu0 %1228
    %1230 = vrot.lane.b32.xlu0 %v1195, 96
    %v1231 = vpop.permute.xlu0 %1230
    %v1232 = vsel %vm248, %v1227, %v1229
    %v1233 = vsel %vm248, %v1229, %v1231
    %v1235 = vsel %vm271, %v1166, %v1198
    %v1239 = vsel %vm271, %v1163, %v1199
    %v1242 = vsel %vm271, %v1192, %v1200
    %v1246 = vsel %vm271, %v1189, %v1201
    %v1250 = vsel %vm271, %v1131, %v1202
    %v1254 = vsel %vm271, %v1132, %v1203
    %v1258 = vsel %vm271, %v1212, %v1222
    %v1262 = vsel %vm271, %v1213, %v1223
    %v1264 = vld [vmem:[%s2] sm:$0xf]
    %v1266 = vsel %vm303, %v1264, 0
    %v1269 = vsel %vm271, %v1232, 0
    %v1272 = vsel %vm271, %v1233, 0
    %1274 = vmatprep.subr.bf16.mxu0 0
    %1275 = vmatpush1.bf16.msra.mxu0 0
    %1276 = vmatprep.subr.bf16.mxu0 0
    %1277 = vmatpush1.bf16.msra.mxu0 0
    %1278 = vmatprep.subr.bf16.mxu0 0
    %1279 = vmatpush1.bf16.msra.mxu0 0
    %1280 = vmatprep.subr.bf16.mxu0 %v1272
    %1281 = vmatpush1.bf16.msra.mxu0 %v1269
    %1282 = vmatprep.subr.bf16.mxu0 %v1262
    %1283 = vmatpush1.bf16.msra.mxu0 %v1258
    %1284 = vmatprep.subr.bf16.mxu0 %v1254
    %1285 = vmatpush1.bf16.msra.mxu0 %v1250
    %1286 = vmatprep.subr.bf16.mxu0 %v1246
    %1287 = vmatpush1.bf16.msra.mxu0 %v1242
    %1288 = vmatprep.subr.bf16.mxu0 %v1239
    %1289 = vmatpush1.bf16.msra.mxu0 %v1235
    %1290 = vmatprep.subr.bf16.mxu0 0
    %1291 = vmatpush2.bf16.msra.mxu0 0
    %1292 = vmatprep.subr.bf16.mxu0 0
    %1293 = vmatpush2.bf16.msra.mxu0 0
    %1294 = vmatprep.subr.bf16.mxu0 0
    %1295 = vmatpush2.bf16.msra.mxu0 0
    %1296 = vmatprep.subr.bf16.mxu0 0
    %1297 = vmatpush2.bf16.msra.mxu0 0
    %1298 = vmatprep.subr.bf16.mxu0 0
    %1299 = vmatpush2.bf16.msra.mxu0 0
    %1300 = vmatprep.subr.bf16.mxu0 0
    %1301 = vmatpush2.bf16.msra.mxu0 0
    %1302 = vmatprep.subr.bf16.mxu0 0
    %1303 = vmatpush2.bf16.msra.mxu0 0
    %1304 = vmatprep.subr.bf16.mxu0 0
    %1305 = vmatpush2.bf16.msra.mxu0 0
    %1306 = vmatprep.mubr.bf16.mxu0 0
    %1307 = vmatmul.mubr.bf16.gmra.mxu0 %v1266
    %v1308 = vpop.f32.mrf.mxu0
    %v1309 = vadd.f32 0.0, %v1308
    %v1310 = vpop.f32.mrf.mxu0
    %v1311 = vadd.f32 0.0, %v1310
    %v1312 = vpop.f32.mrf.mxu0
    %v1313 = vpop.f32.mrf.mxu0
    %1314 = vdwg.mxu0
    %v1315 = vpack.c.bf16 %v1309, %v1309
    %v1316 = vpack.c.bf16 %v1311, %v1311
    %1319 = vrot.lane.b32.xlu0 %v1315, 1
    %v1320 = vpop.permute.xlu0 %1319
    %1321 = vrot.lane.b32.xlu0 %v1316, 1
    %v1322 = vpop.permute.xlu0 %1321
    %v1323 = vsel %vm144, %v1320, %v1322
    %v1326 = vsel %vm147, 0, %v1320
    %v1328 = vsel %vm162, %v1326, 0
    %v1329 = vsel %vm163, %v1323, 0
    %1330 = vrot.lane.b32.xlu0 %v1315, 127
    %v1331 = vpop.permute.xlu0 %1330
    %1332 = vrot.lane.b32.xlu0 %v1316, 127
    %v1333 = vpop.permute.xlu0 %1332
    %v1334 = vsel %vm170, %v1331, %v1333
    %v1337 = vsel %vm173, %v1333, 0
    %v1339 = vsel %vm187, %v1334, 0
    %v1340 = vsel %vm188, %v1337, 0
    %1343 = vrot.lane.b32.xlu0 %v1328, 16
    %v1344 = vpop.permute.xlu0 %1343
    %1345 = vrot.lane.b32.xlu0 %v1329, 16
    %v1346 = vpop.permute.xlu0 %1345
    %v1347 = vsel %vm197, %v1344, %v1346
    %v1349 = vsel %vm200, 0, %v1344
    %v1351 = vsel %vm200, %v1346, 0
    %1352 = vrot.lane.b32.xlu0 %v1315, 16
    %v1353 = vpop.permute.xlu0 %1352
    %1354 = vrot.lane.b32.xlu0 %v1316, 16
    %v1355 = vpop.permute.xlu0 %1354
    %v1356 = vsel %vm197, %v1353, %v1355
    %v1358 = vsel %vm200, 0, %v1353
    %v1360 = vsel %vm200, %v1355, 0
    %1363 = vrot.lane.b32.xlu0 %v1339, 16
    %v1364 = vpop.permute.xlu0 %1363
    %1365 = vrot.lane.b32.xlu0 %v1340, 16
    %v1366 = vpop.permute.xlu0 %1365
    %v1367 = vsel %vm197, %v1364, %v1366
    %v1369 = vsel %vm200, 0, %v1364
    %v1371 = vsel %vm200, %v1366, 0
    %v1373 = vrot.slane %v1358, 4
    %v1374 = vrot.slane %v1356, 4
    %v1375 = vrot.slane %v1328, 4
    %v1376 = vrot.slane %v1329, 4
    %v1377 = vrot.slane %v1339, 4
    %v1378 = vrot.slane %v1340, 4
    %1381 = vrot.lane.b32.xlu0 %v1349, 96
    %v1382 = vpop.permute.xlu0 %1381
    %1383 = vrot.lane.b32.xlu0 %v1347, 96
    %v1384 = vpop.permute.xlu0 %1383
    %1385 = vrot.lane.b32.xlu0 %v1351, 96
    %v1386 = vpop.permute.xlu0 %1385
    %v1387 = vsel %vm248, %v1382, %v1384
    %v1388 = vsel %vm248, %v1384, %v1386
    %v1390 = vrot.slane %v1360, 4
    %1391 = vrot.lane.b32.xlu0 %v1373, 96
    %v1392 = vpop.permute.xlu0 %1391
    %1393 = vrot.lane.b32.xlu0 %v1374, 96
    %v1394 = vpop.permute.xlu0 %1393
    %1395 = vrot.lane.b32.xlu0 %v1390, 96
    %v1396 = vpop.permute.xlu0 %1395
    %v1397 = vsel %vm248, %v1392, %v1394
    %v1398 = vsel %vm248, %v1394, %v1396
    %1401 = vrot.lane.b32.xlu0 %v1369, 96
    %v1402 = vpop.permute.xlu0 %1401
    %1403 = vrot.lane.b32.xlu0 %v1367, 96
    %v1404 = vpop.permute.xlu0 %1403
    %1405 = vrot.lane.b32.xlu0 %v1371, 96
    %v1406 = vpop.permute.xlu0 %1405
    %v1407 = vsel %vm248, %v1402, %v1404
    %v1408 = vsel %vm248, %v1404, %v1406
    %v1410 = vsel %vm271, %v1349, %v1373
    %v1414 = vsel %vm271, %v1347, %v1374
    %v1417 = vsel %vm271, %v1369, %v1375
    %v1421 = vsel %vm271, %v1367, %v1376
    %v1425 = vsel %vm271, %v1315, %v1377
    %v1429 = vsel %vm271, %v1316, %v1378
    %v1433 = vsel %vm271, %v1387, %v1397
    %v1437 = vsel %vm271, %v1388, %v1398
    %v1439 = vld [vmem:[%s3] sm:$0xf]
    %v1441 = vsel %vm303, %v1439, 0
    %v1444 = vsel %vm271, %v1407, 0
    %v1447 = vsel %vm271, %v1408, 0
    %1449 = vmatprep.subr.bf16.mxu0 0
    %1450 = vmatpush1.bf16.msra.mxu0 0
    %1451 = vmatprep.subr.bf16.mxu0 0
    %1452 = vmatpush1.bf16.msra.mxu0 0
    %1453 = vmatprep.subr.bf16.mxu0 0
    %1454 = vmatpush1.bf16.msra.mxu0 0
    %1455 = vmatprep.subr.bf16.mxu0 %v1447
    %1456 = vmatpush1.bf16.msra.mxu0 %v1444
    %1457 = vmatprep.subr.bf16.mxu0 %v1437
    %1458 = vmatpush1.bf16.msra.mxu0 %v1433
    %1459 = vmatprep.subr.bf16.mxu0 %v1429
    %1460 = vmatpush1.bf16.msra.mxu0 %v1425
    %1461 = vmatprep.subr.bf16.mxu0 %v1421
    %1462 = vmatpush1.bf16.msra.mxu0 %v1417
    %1463 = vmatprep.subr.bf16.mxu0 %v1414
    %1464 = vmatpush1.bf16.msra.mxu0 %v1410
    %1465 = vmatprep.subr.bf16.mxu0 0
    %1466 = vmatpush2.bf16.msra.mxu0 0
    %1467 = vmatprep.subr.bf16.mxu0 0
    %1468 = vmatpush2.bf16.msra.mxu0 0
    %1469 = vmatprep.subr.bf16.mxu0 0
    %1470 = vmatpush2.bf16.msra.mxu0 0
    %1471 = vmatprep.subr.bf16.mxu0 0
    %1472 = vmatpush2.bf16.msra.mxu0 0
    %1473 = vmatprep.subr.bf16.mxu0 0
    %1474 = vmatpush2.bf16.msra.mxu0 0
    %1475 = vmatprep.subr.bf16.mxu0 0
    %1476 = vmatpush2.bf16.msra.mxu0 0
    %1477 = vmatprep.subr.bf16.mxu0 0
    %1478 = vmatpush2.bf16.msra.mxu0 0
    %1479 = vmatprep.subr.bf16.mxu0 0
    %1480 = vmatpush2.bf16.msra.mxu0 0
    %1481 = vmatprep.mubr.bf16.mxu0 0
    %1482 = vmatmul.mubr.bf16.gmra.mxu0 %v1441
    %v1483 = vpop.f32.mrf.mxu0
    %v1484 = vadd.f32 0.0, %v1483
    %v1485 = vpop.f32.mrf.mxu0
    %v1486 = vadd.f32 0.0, %v1485
    %v1487 = vpop.f32.mrf.mxu0
    %v1488 = vpop.f32.mrf.mxu0
    %1489 = vdwg.mxu0
    %v1490 = vadd.bf16 %v1166, %v1178
    %v1491 = vadd.bf16 %v1163, %v1175
    %v1492 = vadd.bf16 %v1490, %v1192
    %v1493 = vadd.bf16 %v1491, %v1189
    %v1494 = vunpack.c.l.bf16 %v1492
    %v1495 = vunpack.c.l.bf16 %v1493
    %v1496 = vadd.bf16 %v1144, %v1131
    %v1497 = vadd.bf16 %v1145, %v1132
    %v1498 = vadd.bf16 %v1496, %v1155
    %v1499 = vadd.bf16 %v1497, %v1156
    %v1500 = vunpack.c.l.bf16 %v1498
    %v1501 = vunpack.c.l.bf16 %v1499
    %v1502 = vadd.f32 %v1494, %v1500
    %v1503 = vadd.f32 %v1495, %v1501
    %v1504 = vadd.bf16 %v1169, %v1181
    %v1505 = vadd.bf16 %v1504, %v1195
    %v1506 = vunpack.c.l.bf16 %v1505
    %1510 = vrot.lane.b32.xlu0 %v1494, 96
    %v1511 = vpop.permute.xlu0 %1510
    %1512 = vrot.lane.b32.xlu0 %v1495, 96
    %v1513 = vpop.permute.xlu0 %1512
    %1514 = vrot.lane.b32.xlu0 %v1506, 96
    %v1515 = vpop.permute.xlu0 %1514
    %v1516 = vsel %vm555, %v1511, %v1513
    %v1517 = vsel %vm555, %v1513, %v1515
    %v1520 = vadd.f32 %v1502, %v1516
    %v1521 = vadd.f32 %v1503, %v1517
    %v1522 = vmul.f32 %v1520, 0.11111111
    %v1523 = vmul.f32 %v1521, 0.11111111
    %v1524 = vpack.c.bf16 %v1522, %v1522
    %v1525 = vpack.c.bf16 %v1523, %v1523
    %1528 = vrot.lane.b32.xlu0 %v1524, 1
    %v1529 = vpop.permute.xlu0 %1528
    %1530 = vrot.lane.b32.xlu0 %v1525, 1
    %v1531 = vpop.permute.xlu0 %1530
    %v1532 = vsel %vm144, %v1529, %v1531
    %v1535 = vsel %vm147, 0, %v1529
    %v1537 = vsel %vm162, %v1535, 0
    %v1538 = vsel %vm163, %v1532, 0
    %1539 = vrot.lane.b32.xlu0 %v1524, 127
    %v1540 = vpop.permute.xlu0 %1539
    %1541 = vrot.lane.b32.xlu0 %v1525, 127
    %v1542 = vpop.permute.xlu0 %1541
    %v1543 = vsel %vm170, %v1540, %v1542
    %v1546 = vsel %vm173, %v1542, 0
    %v1548 = vsel %vm187, %v1543, 0
    %v1549 = vsel %vm188, %v1546, 0
    %1552 = vrot.lane.b32.xlu0 %v1537, 16
    %v1553 = vpop.permute.xlu0 %1552
    %1554 = vrot.lane.b32.xlu0 %v1538, 16
    %v1555 = vpop.permute.xlu0 %1554
    %v1556 = vsel %vm197, %v1553, %v1555
    %v1558 = vsel %vm200, 0, %v1553
    %v1560 = vsel %vm200, %v1555, 0
    %1561 = vrot.lane.b32.xlu0 %v1524, 16
    %v1562 = vpop.permute.xlu0 %1561
    %1563 = vrot.lane.b32.xlu0 %v1525, 16
    %v1564 = vpop.permute.xlu0 %1563
    %v1565 = vsel %vm197, %v1562, %v1564
    %v1567 = vsel %vm200, 0, %v1562
    %v1569 = vsel %vm200, %v1564, 0
    %1572 = vrot.lane.b32.xlu0 %v1548, 16
    %v1573 = vpop.permute.xlu0 %1572
    %1574 = vrot.lane.b32.xlu0 %v1549, 16
    %v1575 = vpop.permute.xlu0 %1574
    %v1576 = vsel %vm197, %v1573, %v1575
    %v1578 = vsel %vm200, 0, %v1573
    %v1580 = vsel %vm200, %v1575, 0
    %v1582 = vrot.slane %v1567, 4
    %v1583 = vrot.slane %v1565, 4
    %v1584 = vrot.slane %v1537, 4
    %v1585 = vrot.slane %v1538, 4
    %v1586 = vrot.slane %v1548, 4
    %v1587 = vrot.slane %v1549, 4
    %1590 = vrot.lane.b32.xlu0 %v1558, 96
    %v1591 = vpop.permute.xlu0 %1590
    %1592 = vrot.lane.b32.xlu0 %v1556, 96
    %v1593 = vpop.permute.xlu0 %1592
    %1594 = vrot.lane.b32.xlu0 %v1560, 96
    %v1595 = vpop.permute.xlu0 %1594
    %v1596 = vsel %vm248, %v1591, %v1593
    %v1597 = vsel %vm248, %v1593, %v1595
    %v1599 = vrot.slane %v1569, 4
    %1600 = vrot.lane.b32.xlu0 %v1582, 96
    %v1601 = vpop.permute.xlu0 %1600
    %1602 = vrot.lane.b32.xlu0 %v1583, 96
    %v1603 = vpop.permute.xlu0 %1602
    %1604 = vrot.lane.b32.xlu0 %v1599, 96
    %v1605 = vpop.permute.xlu0 %1604
    %v1606 = vsel %vm248, %v1601, %v1603
    %v1607 = vsel %vm248, %v1603, %v1605
    %1610 = vrot.lane.b32.xlu0 %v1578, 96
    %v1611 = vpop.permute.xlu0 %1610
    %1612 = vrot.lane.b32.xlu0 %v1576, 96
    %v1613 = vpop.permute.xlu0 %1612
    %1614 = vrot.lane.b32.xlu0 %v1580, 96
    %v1615 = vpop.permute.xlu0 %1614
    %v1616 = vsel %vm248, %v1611, %v1613
    %v1617 = vsel %vm248, %v1613, %v1615
    %v1619 = vsel %vm271, %v1558, %v1582
    %v1623 = vsel %vm271, %v1556, %v1583
    %v1626 = vsel %vm271, %v1578, %v1584
    %v1630 = vsel %vm271, %v1576, %v1585
    %v1634 = vsel %vm271, %v1524, %v1586
    %v1638 = vsel %vm271, %v1525, %v1587
    %v1642 = vsel %vm271, %v1596, %v1606
    %v1646 = vsel %vm271, %v1597, %v1607
    %v1648 = vld [vmem:[%s4] sm:$0xf]
    %v1650 = vsel %vm303, %v1648, 0
    %v1653 = vsel %vm271, %v1616, 0
    %v1656 = vsel %vm271, %v1617, 0
    %1658 = vmatprep.subr.bf16.mxu0 0
    %1659 = vmatpush1.bf16.msra.mxu0 0
    %1660 = vmatprep.subr.bf16.mxu0 0
    %1661 = vmatpush1.bf16.msra.mxu0 0
    %1662 = vmatprep.subr.bf16.mxu0 0
    %1663 = vmatpush1.bf16.msra.mxu0 0
    %1664 = vmatprep.subr.bf16.mxu0 %v1656
    %1665 = vmatpush1.bf16.msra.mxu0 %v1653
    %1666 = vmatprep.subr.bf16.mxu0 %v1646
    %1667 = vmatpush1.bf16.msra.mxu0 %v1642
    %1668 = vmatprep.subr.bf16.mxu0 %v1638
    %1669 = vmatpush1.bf16.msra.mxu0 %v1634
    %1670 = vmatprep.subr.bf16.mxu0 %v1630
    %1671 = vmatpush1.bf16.msra.mxu0 %v1626
    %1672 = vmatprep.subr.bf16.mxu0 %v1623
    %1673 = vmatpush1.bf16.msra.mxu0 %v1619
    %1674 = vmatprep.subr.bf16.mxu0 0
    %1675 = vmatpush2.bf16.msra.mxu0 0
    %1676 = vmatprep.subr.bf16.mxu0 0
    %1677 = vmatpush2.bf16.msra.mxu0 0
    %1678 = vmatprep.subr.bf16.mxu0 0
    %1679 = vmatpush2.bf16.msra.mxu0 0
    %1680 = vmatprep.subr.bf16.mxu0 0
    %1681 = vmatpush2.bf16.msra.mxu0 0
    %1682 = vmatprep.subr.bf16.mxu0 0
    %1683 = vmatpush2.bf16.msra.mxu0 0
    %1684 = vmatprep.subr.bf16.mxu0 0
    %1685 = vmatpush2.bf16.msra.mxu0 0
    %1686 = vmatprep.subr.bf16.mxu0 0
    %1687 = vmatpush2.bf16.msra.mxu0 0
    %1688 = vmatprep.subr.bf16.mxu0 0
    %1689 = vmatpush2.bf16.msra.mxu0 0
    %1690 = vmatprep.mubr.bf16.mxu0 0
    %1691 = vmatmul.mubr.bf16.gmra.mxu0 %v1650
    %v1692 = vpop.f32.mrf.mxu0
    %v1693 = vadd.f32 0.0, %v1692
    %v1694 = vpop.f32.mrf.mxu0
    %v1695 = vadd.f32 0.0, %v1694
    %v1696 = vpop.f32.mrf.mxu0
    %v1697 = vpop.f32.mrf.mxu0
    %1698 = vdwg.mxu0
    %v1699 = vld [vmem:[%s5] sm:$0xf]
    %v1700 = vld [vmem:[%s5 + $0x4] sm:$0xf]
    %v1701 = vld [vmem:[%s5 + $0x8] sm:$0xf]
    %v1702 = vld [vmem:[%s5 + $0xc] sm:$0xf]
    %v1703 = vpack.c.bf16 %v1484, %v1484
    %v1704 = vpack.c.bf16 %v1486, %v1486
    %v1709 = vunpack.c.l.b16 %v1699
    %v1710 = vunpack.c.l.b16 %v1700
    %v1711 = vunpack.c.l.b16 %v1701
    %v1712 = vunpack.c.l.b16 %v1702
    %v1713 = vpack.c.b16 %v1710, %v1709
    %v1714 = vpack.c.b16 %v1712, %v1711
    %1715 = vrot.lane.b32.xlu0 %v1713, 120
    %v1716 = vpop.permute.xlu0 %1715
    %1717 = vrot.lane.b32.xlu0 %v1714, 120
    %v1718 = vpop.permute.xlu0 %1717
    %v1720 = vsel %vm759, %v1716, 0
    %v1723 = vsel %vm759, %v1718, 0
    %v1726 = vsel %vm271, %v1703, 0
    %v1729 = vsel %vm271, %v1704, 0
    %1731 = vmatprep.subr.bf16.mxu0 0
    %1732 = vmatpush1.bf16.msra.mxu0 0
    %1733 = vmatprep.subr.bf16.mxu0 0
    %1734 = vmatpush1.bf16.msra.mxu0 0
    %1735 = vmatprep.subr.bf16.mxu0 0
    %1736 = vmatpush1.bf16.msra.mxu0 0
    %1737 = vmatprep.subr.bf16.mxu0 0
    %1738 = vmatpush1.bf16.msra.mxu0 0
    %1739 = vmatprep.subr.bf16.mxu0 0
    %1740 = vmatpush1.bf16.msra.mxu0 0
    %1741 = vmatprep.subr.bf16.mxu0 0
    %1742 = vmatpush1.bf16.msra.mxu0 0
    %1743 = vmatprep.subr.bf16.mxu0 0
    %1744 = vmatpush1.bf16.msra.mxu0 0
    %1745 = vmatprep.subr.bf16.mxu0 %v1729
    %1746 = vmatpush1.bf16.msra.mxu0 %v1726
    %1747 = vmatprep.subr.bf16.mxu0 0
    %1748 = vmatpush2.bf16.msra.mxu0 0
    %1749 = vmatprep.subr.bf16.mxu0 0
    %1750 = vmatpush2.bf16.msra.mxu0 0
    %1751 = vmatprep.subr.bf16.mxu0 0
    %1752 = vmatpush2.bf16.msra.mxu0 0
    %1753 = vmatprep.subr.bf16.mxu0 0
    %1754 = vmatpush2.bf16.msra.mxu0 0
    %1755 = vmatprep.subr.bf16.mxu0 0
    %1756 = vmatpush2.bf16.msra.mxu0 0
    %1757 = vmatprep.subr.bf16.mxu0 0
    %1758 = vmatpush2.bf16.msra.mxu0 0
    %1759 = vmatprep.subr.bf16.mxu0 0
    %1760 = vmatpush2.bf16.msra.mxu0 0
    %1761 = vmatprep.subr.bf16.mxu0 0
    %1762 = vmatpush2.bf16.msra.mxu0 0
    %1763 = vmatprep.mubr.bf16.mxu0 0
    %1764 = vmatmul.mubr.bf16.gmra.mxu0 %v1720
    %v1765 = vpop.f32.mrf.mxu0
    %v1766 = vadd.f32 0.0, %v1765
    %v1767 = vpop.f32.mrf.mxu0
    %v1768 = vadd.f32 0.0, %v1767
    %v1769 = vpop.f32.mrf.mxu0
    %v1770 = vadd.f32 0.0, %v1769
    %v1771 = vpop.f32.mrf.mxu0
    %v1772 = vadd.f32 0.0, %v1771
    %1773 = vmatprep.mubr.bf16.mxu0 0
    %1774 = vmatmul.mubr.bf16.gmra.mxu0 %v1723
    %v1775 = vpop.f32.mrf.mxu0
    %v1776 = vadd.f32 0.0, %v1775
    %v1777 = vpop.f32.mrf.mxu0
    %v1778 = vadd.f32 0.0, %v1777
    %v1779 = vpop.f32.mrf.mxu0
    %v1780 = vadd.f32 0.0, %v1779
    %v1781 = vpop.f32.mrf.mxu0
    %v1782 = vadd.f32 0.0, %v1781
    %1783 = vdwg.mxu0
    %v1785 = vsel %vm759, %v1713, 0
    %v1788 = vsel %vm759, %v1714, 0
    %v1790 = vsel %vm271, %v1524, 0
    %v1792 = vsel %vm271, %v1525, 0
    %1794 = vmatprep.subr.bf16.mxu0 0
    %1795 = vmatpush1.bf16.msra.mxu0 0
    %1796 = vmatprep.subr.bf16.mxu0 0
    %1797 = vmatpush1.bf16.msra.mxu0 0
    %1798 = vmatprep.subr.bf16.mxu0 0
    %1799 = vmatpush1.bf16.msra.mxu0 0
    %1800 = vmatprep.subr.bf16.mxu0 0
    %1801 = vmatpush1.bf16.msra.mxu0 0
    %1802 = vmatprep.subr.bf16.mxu0 0
    %1803 = vmatpush1.bf16.msra.mxu0 0
    %1804 = vmatprep.subr.bf16.mxu0 0
    %1805 = vmatpush1.bf16.msra.mxu0 0
    %1806 = vmatprep.subr.bf16.mxu0 0
    %1807 = vmatpush1.bf16.msra.mxu0 0
    %1808 = vmatprep.subr.bf16.mxu0 %v1792
    %1809 = vmatpush1.bf16.msra.mxu0 %v1790
    %1810 = vmatprep.subr.bf16.mxu0 0
    %1811 = vmatpush2.bf16.msra.mxu0 0
    %1812 = vmatprep.subr.bf16.mxu0 0
    %1813 = vmatpush2.bf16.msra.mxu0 0
    %1814 = vmatprep.subr.bf16.mxu0 0
    %1815 = vmatpush2.bf16.msra.mxu0 0
    %1816 = vmatprep.subr.bf16.mxu0 0
    %1817 = vmatpush2.bf16.msra.mxu0 0
    %1818 = vmatprep.subr.bf16.mxu0 0
    %1819 = vmatpush2.bf16.msra.mxu0 0
    %1820 = vmatprep.subr.bf16.mxu0 0
    %1821 = vmatpush2.bf16.msra.mxu0 0
    %1822 = vmatprep.subr.bf16.mxu0 0
    %1823 = vmatpush2.bf16.msra.mxu0 0
    %1824 = vmatprep.subr.bf16.mxu0 0
    %1825 = vmatpush2.bf16.msra.mxu0 0
    %1826 = vmatprep.mubr.bf16.mxu0 0
    %1827 = vmatmul.mubr.bf16.gmra.mxu0 %v1785
    %v1828 = vpop.f32.mrf.mxu0
    %v1829 = vadd.f32 %v1766, %v1828
    %v1830 = vpop.f32.mrf.mxu0
    %v1831 = vadd.f32 %v1768, %v1830
    %v1832 = vpop.f32.mrf.mxu0
    %v1833 = vadd.f32 %v1770, %v1832
    %v1834 = vpop.f32.mrf.mxu0
    %v1835 = vadd.f32 %v1772, %v1834
    %1836 = vmatprep.mubr.bf16.mxu0 0
    %1837 = vmatmul.mubr.bf16.gmra.mxu0 %v1788
    %v1838 = vpop.f32.mrf.mxu0
    %v1839 = vadd.f32 %v1776, %v1838
    %v1840 = vpop.f32.mrf.mxu0
    %v1841 = vadd.f32 %v1778, %v1840
    %v1842 = vpop.f32.mrf.mxu0
    %v1843 = vadd.f32 %v1780, %v1842
    %v1844 = vpop.f32.mrf.mxu0
    %v1845 = vadd.f32 %v1782, %v1844
    %1846 = vdwg.mxu0
    %v1847 = vpack.c.bf16 %v1693, %v1693
    %v1848 = vpack.c.bf16 %v1695, %v1695
    %1849 = vrot.lane.b32.xlu0 %v1713, 112
    %v1850 = vpop.permute.xlu0 %1849
    %1851 = vrot.lane.b32.xlu0 %v1714, 112
    %v1852 = vpop.permute.xlu0 %1851
    %v1854 = vsel %vm759, %v1850, 0
    %v1857 = vsel %vm759, %v1852, 0
    %v1860 = vsel %vm271, %v1847, 0
    %v1863 = vsel %vm271, %v1848, 0
    %1865 = vmatprep.subr.bf16.mxu0 0
    %1866 = vmatpush1.bf16.msra.mxu0 0
    %1867 = vmatprep.subr.bf16.mxu0 0
    %1868 = vmatpush1.bf16.msra.mxu0 0
    %1869 = vmatprep.subr.bf16.mxu0 0
    %1870 = vmatpush1.bf16.msra.mxu0 0
    %1871 = vmatprep.subr.bf16.mxu0 0
    %1872 = vmatpush1.bf16.msra.mxu0 0
    %1873 = vmatprep.subr.bf16.mxu0 0
    %1874 = vmatpush1.bf16.msra.mxu0 0
    %1875 = vmatprep.subr.bf16.mxu0 0
    %1876 = vmatpush1.bf16.msra.mxu0 0
    %1877 = vmatprep.subr.bf16.mxu0 0
    %1878 = vmatpush1.bf16.msra.mxu0 0
    %1879 = vmatprep.subr.bf16.mxu0 %v1863
    %1880 = vmatpush1.bf16.msra.mxu0 %v1860
    %1881 = vmatprep.subr.bf16.mxu0 0
    %1882 = vmatpush2.bf16.msra.mxu0 0
    %1883 = vmatprep.subr.bf16.mxu0 0
    %1884 = vmatpush2.bf16.msra.mxu0 0
    %1885 = vmatprep.subr.bf16.mxu0 0
    %1886 = vmatpush2.bf16.msra.mxu0 0
    %1887 = vmatprep.subr.bf16.mxu0 0
    %1888 = vmatpush2.bf16.msra.mxu0 0
    %1889 = vmatprep.subr.bf16.mxu0 0
    %1890 = vmatpush2.bf16.msra.mxu0 0
    %1891 = vmatprep.subr.bf16.mxu0 0
    %1892 = vmatpush2.bf16.msra.mxu0 0
    %1893 = vmatprep.subr.bf16.mxu0 0
    %1894 = vmatpush2.bf16.msra.mxu0 0
    %1895 = vmatprep.subr.bf16.mxu0 0
    %1896 = vmatpush2.bf16.msra.mxu0 0
    %1897 = vmatprep.mubr.bf16.mxu0 0
    %1898 = vmatmul.mubr.bf16.gmra.mxu0 %v1854
    %v1899 = vpop.f32.mrf.mxu0
    %v1900 = vadd.f32 0.0, %v1899
    %v1901 = vpop.f32.mrf.mxu0
    %v1902 = vadd.f32 0.0, %v1901
    %v1903 = vpop.f32.mrf.mxu0
    %v1904 = vadd.f32 0.0, %v1903
    %v1905 = vpop.f32.mrf.mxu0
    %v1906 = vadd.f32 0.0, %v1905
    %1907 = vmatprep.mubr.bf16.mxu0 0
    %1908 = vmatmul.mubr.bf16.gmra.mxu0 %v1857
    %v1909 = vpop.f32.mrf.mxu0
    %v1910 = vadd.f32 0.0, %v1909
    %v1911 = vpop.f32.mrf.mxu0
    %v1912 = vadd.f32 0.0, %v1911
    %v1913 = vpop.f32.mrf.mxu0
    %v1914 = vadd.f32 0.0, %v1913
    %v1915 = vpop.f32.mrf.mxu0
    %v1916 = vadd.f32 0.0, %v1915
    %1917 = vdwg.mxu0
    %v1918 = vadd.f32 %v1829, %v1900
    %v1919 = vadd.f32 %v1831, %v1902
    %v1920 = vadd.f32 %v1833, %v1904
    %v1921 = vadd.f32 %v1835, %v1906
    %v1922 = vadd.f32 %v1839, %v1910
    %v1923 = vadd.f32 %v1841, %v1912
    %v1924 = vadd.f32 %v1843, %v1914
    %v1925 = vadd.f32 %v1845, %v1916
    %v1926 = vadd.f32 %v1918, %v1074
    %v1927 = vadd.f32 %v1919, %v1075
    %v1928 = vadd.f32 %v1920, %v1076
    %v1929 = vadd.f32 %v1921, %v1077
    %v1930 = vadd.f32 %v1922, %v1078
    %v1931 = vadd.f32 %v1923, %v1079
    %v1932 = vadd.f32 %v1924, %v1080
    %v1933 = vadd.f32 %v1925, %v1081
    %v1934 = vadd.f32 %v1926, %v1927
    %1935 = vadd.xlane.f32.xlu0 %v1934
    %v1936 = vpop.xlane.xlu0 %1935
    %v1937 = vadd.f32 %v1928, %v1929
    %1938 = vadd.xlane.f32.xlu0 %v1937
    %v1939 = vpop.xlane.xlu0 %1938
    %v1940 = vadd.f32 %v1930, %v1931
    %1941 = vadd.xlane.f32.xlu0 %v1940
    %v1942 = vpop.xlane.xlu0 %1941
    %v1943 = vadd.f32 %v1932, %v1933
    %1944 = vadd.xlane.f32.xlu0 %v1943
    %v1945 = vpop.xlane.xlu0 %1944
    %v1946 = vmul.f32 %v1936, 0.00390625
    %v1947 = vmul.f32 %v1939, 0.00390625
    %v1948 = vmul.f32 %v1942, 0.00390625
    %v1949 = vmul.f32 %v1945, 0.00390625
    %v1950 = vld [vmem:[%s6] sm:$0xff]
    %v1951 = vld [vmem:[%s6 + $0x8] sm:$0xff]
    %v1952 = vld [vmem:[%s6 + $0x10] sm:$0xff]
    %v1953 = vld [vmem:[%s6 + $0x18] sm:$0xff]
    %v1954 = vmul.f32 %v1950, %v1946
    %v1955 = vmul.f32 %v1951, %v1947
    %v1956 = vmul.f32 %v1952, %v1948
    %v1957 = vmul.f32 %v1953, %v1949
    %v1958 = vsel %vm759, %v1954, 0.0
    %v1959 = vsel %vm759, %v1955, 0.0
    %v1960 = vadd.f32 %v1958, %v1959
    %v1961 = vsel %vm759, %v1956, 0.0
    %v1962 = vadd.f32 %v1960, %v1961
    %v1963 = vsel %vm759, %v1957, 0.0
    %v1964 = vadd.f32 %v1962, %v1963
    %v1965 = vrot.slane %v1964, 4
    %v1966 = vadd.f32 %v1964, %v1965
    %v1967 = vrot.slane %v1966, 2
    %v1968 = vadd.f32 %v1966, %v1967
    %v1969 = vrot.slane %v1968, 1
    %v1970 = vadd.f32 %v1968, %v1969
    %v1971 = vmax.f32 %v1970, 0.0
    %v1972 = vld [vmem:[%s7] sm:$0xff]
    %v1973 = vld [vmem:[%s7 + $0x8] sm:$0xff]
    %v1974 = vld [vmem:[%s7 + $0x10] sm:$0xff]
    %v1975 = vld [vmem:[%s7 + $0x18] sm:$0xff]
    %v1976 = vmul.f32 %v1972, %v1971
    %v1977 = vmul.f32 %v1973, %v1971
    %v1978 = vmul.f32 %v1974, %v1971
    %v1979 = vmul.f32 %v1975, %v1971
    %v1980 = vsel %vm759, %v1976, 0.0
    %1981 = vadd.xlane.f32.xlu0 %v1980
    %v1982 = vpop.xlane.xlu0 %1981
    %v1983 = vsel %vm759, %v1977, 0.0
    %1984 = vadd.xlane.f32.xlu0 %v1983
    %v1985 = vpop.xlane.xlu0 %1984
    %v1986 = vsel %vm759, %v1978, 0.0
    %1987 = vadd.xlane.f32.xlu0 %v1986
    %v1988 = vpop.xlane.xlu0 %1987
    %v1989 = vsel %vm759, %v1979, 0.0
    %1990 = vadd.xlane.f32.xlu0 %v1989
    %v1991 = vpop.xlane.xlu0 %1990
    %v1992 = vxor.u32 %v1982, 2147483648
    %v1993 = vxor.u32 %v1985, 2147483648
    %v1994 = vxor.u32 %v1988, 2147483648
    %v1995 = vxor.u32 %v1991, 2147483648
    %v1996 = vmul.f32 %v1992, 1.442695
    %v1997 = vpow.pop %v1996
    %v1998 = vmul.f32 %v1993, 1.442695
    %v1999 = vpow.pop %v1998
    %v2000 = vmul.f32 %v1994, 1.442695
    %v2001 = vpow.pop %v2000
    %v2002 = vmul.f32 %v1995, 1.442695
    %v2003 = vpow.pop %v2002
    %v2004 = vadd.f32 %v1997, 1.0
    %v2005 = vadd.f32 %v1999, 1.0
    %v2006 = vadd.f32 %v2001, 1.0
    %v2007 = vadd.f32 %v2003, 1.0
    %v2008 = vrcp.pop %v2004
    %v2009 = vmul.f32 1.0, %v2008
    %v2010 = vrcp.pop %v2005
    %v2011 = vmul.f32 1.0, %v2010
    %v2012 = vrcp.pop %v2006
    %v2013 = vmul.f32 1.0, %v2012
    %v2014 = vrcp.pop %v2007
    %v2015 = vmul.f32 1.0, %v2014
    %v2016 = vmul.f32 %v1926, %v2009
    %v2017 = vmul.f32 %v1927, %v2009
    %v2018 = vmul.f32 %v1928, %v2011
    %v2019 = vmul.f32 %v1929, %v2011
    %v2020 = vmul.f32 %v1930, %v2013
    %v2021 = vmul.f32 %v1931, %v2013
    %v2022 = vmul.f32 %v1932, %v2015
    %v2023 = vmul.f32 %v1933, %v2015
    %s2024 = scalar_lea.vmem [#allocation5], 64
    %2025 = vst [vmem:[%s2024] sm:$0xff] %v2016
    %2026 = vst [vmem:[%s2024 + $0x8] sm:$0xff] %v2017
    %2027 = vst [vmem:[%s2024 + $0x10] sm:$0xff] %v2018
    %2028 = vst [vmem:[%s2024 + $0x18] sm:$0xff] %v2019
    %2029 = vst [vmem:[%s2024 + $0x20] sm:$0xff] %v2020
    %2030 = vst [vmem:[%s2024 + $0x28] sm:$0xff] %v2021
    %2031 = vst [vmem:[%s2024 + $0x30] sm:$0xff] %v2022
    %2032 = vst [vmem:[%s2024 + $0x38] sm:$0xff] %v2023
    // Predicated region
    $region38: #{tpu_custom_call.1} parent=1 // pred_check
      _
    $region39: #{tpu_custom_call.1} parent=1 // pred_check_branch
      %2034 = sbr.rel (0) target = $region41
    $region40: #{tpu_custom_call.1} parent=1 // pred_region
      %s2036 = ssub.s32 2048, 2048
      %2037 = vsyncadd [#allocation4], %s2036
      %s2038 = sshll.u32 [#allocation5], 4
      %s2039 = int_to_ptr.vmem [resolvable:$true] %s2038
      %2044 = dma.vmem_to_hbm [thread:$0]  %s2039, 2048, %s8, [#allocation4], 256, 256, 16
    $region41: #{tpu_custom_call.1} parent=1 // pred_fallthru
      _
    // Predicated region
    $region42: #{tpu_custom_call.1} parent=1 // pred_check
      _
    $region43: #{tpu_custom_call.1} parent=1 // pred_check_branch
      %2046 = sbr.rel (0) target = $region45
    $region44: #{tpu_custom_call.1} parent=1 // pred_region
      %2047 = dma.done [#allocation4], 2048
    $region45: #{tpu_custom_call.1} parent=1 // pred_fallthru
      _
    %2048 = vsyncpa [#allocation3], 1
    %2049 = vsyncpa [#allocation4], 1

</llo_original>
